<compile_context>
chip_gen: v6e
topology: v6e:2x2x1
jax: 0.10.0
libtpu: 0.0.40
codegen_flags: <defaults>
</compile_context>

<pallas_src>
import jax
import jax.numpy as jnp
from jax.experimental import pallas as pl
from jax.experimental.pallas import tpu as pltpu

_MM_DTYPE = jnp.bfloat16          # matmul-input dtype (accumulation stays f32)
_VMEM_LIMIT = 32 * 1024 * 1024    # explicit scoped-VMEM limit (v5e..v7x safe)
_CONV_BLOCK_B = 128               # images per conv grid step: 128*196 and
                                  # 128*25 lanes are exact multiples of 128
_FC_MAX_TILE_M = 128              # FC batch tile (>=2 grid steps at B>=256)


def _round_up(x, m):
    return -(-x // m) * m


# ---------------------------------------------------------------------------
# Pallas kernels
# ---------------------------------------------------------------------------

def _conv_relu_pool_kernel(p_ref, w_ref, b_ref, o_ref):
    """Fused conv(matmul) + bias + ReLU + 2x2 max-pool for ONE image block.

    p_ref: [1, 4, K, Bblk*P]  im2col patches (bf16), one slab per pool phase
    w_ref: [Cout, K]          conv weights, taps flattened (bf16)
    b_ref: [Cout, 1]          conv bias (f32)
    o_ref: [1, Cout, Bblk*P]  pooled output block (f32), lane-dense

    The phase-max accumulates directly into the VMEM output block so live
    vregs stay bounded regardless of block size.
    """
    w = w_ref[...]
    o_ref[0] = jnp.dot(w, p_ref[0, 0], preferred_element_type=jnp.float32)
    for ph in range(1, 4):
        o_ref[0] = jnp.maximum(
            o_ref[0],
            jnp.dot(w, p_ref[0, ph], preferred_element_type=jnp.float32))
    # Bias is phase-independent and ReLU is monotone -> add/clamp once after max.
    o_ref[0] = jnp.maximum(o_ref[0] + b_ref[...], 0.0)


def _fc_fused_kernel(x_ref, w1_ref, b1_ref, w2_ref, b2_ref, w3_ref, b3_ref,
                     feat_ref, logits_ref):
    """fc1+ReLU -> fc2+ReLU -> fc3; intermediates stay in VMEM/vregs.

    All output widths are pre-padded to 128 (lane-dense stores); weights are
    bf16, biases and accumulation f32.
    """
    h1 = jnp.dot(x_ref[...], w1_ref[...], preferred_element_type=jnp.float32)
    h1 = jnp.maximum(h1 + b1_ref[...], 0.0)
    h2 = jnp.dot(h1.astype(w2_ref.dtype), w2_ref[...],
                 preferred_element_type=jnp.float32)
    h2 = jnp.maximum(h2 + b2_ref[...], 0.0)
    feat_ref[...] = h2.astype(feat_ref.dtype)
    h3 = jnp.dot(h2.astype(w3_ref.dtype), w3_ref[...],
                 preferred_element_type=jnp.float32)
    logits_ref[...] = (h3 + b3_ref[...]).astype(logits_ref.dtype)


# ---------------------------------------------------------------------------
# Plain-JAX glue: block-major, phase-split im2col (slicing/stack/reshape only)
# ---------------------------------------------------------------------------

def _im2col_pooled_blocked(xb, kh, kw):
    """xb: [nb, Cin, Bblk, H, W] (padded) -> (patches [nb, 4, K, Bblk*PH*PW], PH, PW).

    Phase p = 2*di + dj holds the im2col columns of the conv outputs located
    at (2h+di, 2w+dj); the kernel max-reduces over the 4 phases == MaxPool2d(2).
    Block-major input means no transpose is needed anywhere in this glue.
    """
    nb, Cin, Bblk, H, W = xb.shape
    OH, OW = H - kh + 1, W - kw + 1
    PH, PW = OH // 2, OW // 2
    phases = []
    for di in range(2):
        for dj in range(2):
            taps = [xb[:, :, :,
                       di + i: di + i + 2 * PH: 2,
                       dj + j: dj + j + 2 * PW: 2]       # [nb, Cin, Bblk, PH, PW]
                    for i in range(kh) for j in range(kw)]
            t = jnp.stack(taps, axis=2)                   # [nb, Cin, kh*kw, Bblk, PH, PW]
            phases.append(t.reshape(nb, Cin * kh * kw, Bblk * PH * PW))
    return jnp.stack(phases, axis=1), PH, PW              # [nb, 4, K, Bblk*P]


# ---------------------------------------------------------------------------
# Layer wrappers
# ---------------------------------------------------------------------------

def conv2d_relu_pool_blocked(xb, w2d, b2d, *, kh, kw, padding):
    """PyTorch Conv2d(stride=1, padding) + ReLU + MaxPool2d(2), fully fused.

    xb:  [nb, Cin, Bblk, H, W] block-major activations
    w2d: [Cout, Cin*kh*kw]; b2d: [Cout, 1]  ->  [nb, Cout, Bblk, PH, PW] (f32)
    """
    nb, Cin, Bblk, H, W = xb.shape
    Cout, K = w2d.shape
    if padding:
        xb = jnp.pad(xb, ((0, 0), (0, 0), (0, 0),
                          (padding, padding), (padding, padding)))
    patches, PH, PW = _im2col_pooled_blocked(xb.astype(_MM_DTYPE), kh, kw)
    BP = Bblk * PH * PW
    out = pl.pallas_call(
        _conv_relu_pool_kernel,
        out_shape=jax.ShapeDtypeStruct((nb, Cout, BP), jnp.float32),
        grid=(nb,),
        in_specs=[
            pl.BlockSpec((1, 4, K, BP), lambda b: (b, 0, 0, 0)),
            pl.BlockSpec((Cout, K), lambda b: (0, 0)),
            pl.BlockSpec((Cout, 1), lambda b: (0, 0)),
        ],
        out_specs=pl.BlockSpec((1, Cout, BP), lambda b: (b, 0, 0)),
        compiler_params=pltpu.CompilerParams(
            dimension_semantics=("parallel",),
            vmem_limit_bytes=_VMEM_LIMIT),
    )(patches, w2d.astype(_MM_DTYPE), b2d)
    return out.reshape(nb, Cout, Bblk, PH, PW)


def fc_head(x, w1, b1, w2, b2, w3, b3):
    """Fused fc1+ReLU -> fc2+ReLU -> fc3.  x: [B, 400] -> (feat, logits),
    both [B, 128] (padded widths); caller slices the real 84 / 10 columns."""
    B, Din = x.shape
    H1, H2, H3 = w1.shape[1], w2.shape[1], w3.shape[1]
    # Smallest sublane-aligned batch tile that divides the padded batch with
    # little slack (avoids e.g. padding 300 -> 512).
    B8 = _round_up(B, 8)
    if B8 <= _FC_MAX_TILE_M:
        tm = B8
    else:
        nsteps = -(-B8 // _FC_MAX_TILE_M)
        tm = _round_up(-(-B8 // nsteps), 8)
    Mp = _round_up(B8, tm)
    x = x.astype(_MM_DTYPE)
    if Mp != B:
        x = jnp.pad(x, ((0, Mp - B), (0, 0)))
    feat, logits = pl.pallas_call(
        _fc_fused_kernel,
        out_shape=(jax.ShapeDtypeStruct((Mp, H2), jnp.float32),
                   jax.ShapeDtypeStruct((Mp, H3), jnp.float32)),
        grid=(Mp // tm,),
        in_specs=[
            pl.BlockSpec((tm, Din), lambda i: (i, 0)),
            pl.BlockSpec((Din, H1), lambda i: (0, 0)),
            pl.BlockSpec((1, H1), lambda i: (0, 0)),
            pl.BlockSpec((H1, H2), lambda i: (0, 0)),
            pl.BlockSpec((1, H2), lambda i: (0, 0)),
            pl.BlockSpec((H2, H3), lambda i: (0, 0)),
            pl.BlockSpec((1, H3), lambda i: (0, 0)),
        ],
        out_specs=(pl.BlockSpec((tm, H2), lambda i: (i, 0)),
                   pl.BlockSpec((tm, H3), lambda i: (i, 0))),
        compiler_params=pltpu.CompilerParams(
            dimension_semantics=("parallel",),
            vmem_limit_bytes=_VMEM_LIMIT),
    )(x, w1, b1, w2, b2, w3, b3)
    return feat[:B], logits[:B]


# ---------------------------------------------------------------------------
# Parameter init (deterministic, PyTorch-like uniform fan-in init).
# Layouts are kernel-friendly: conv W [Cout, Cin*k*k] bf16, conv b [Cout,1] f32,
# fc W pre-transposed [in, out] and ZERO-padded to 128-wide (bf16, exact),
# fc b [1, out_pad] f32.  Padded rows/cols are exactly zero and sliced off.
# ---------------------------------------------------------------------------

def _uniform(key, shape, bound):
    return jax.random.uniform(key, shape, jnp.float32, -bound, bound)


def init_lenet_params(key):
    ks = jax.random.split(key, 10)
    p = {}
    bc1 = (1 * 5 * 5) ** -0.5
    p["conv1_w"] = _uniform(ks[0], (6, 25), bc1).astype(_MM_DTYPE)
    p["conv1_b"] = _uniform(ks[1], (6, 1), bc1)
    bc2 = (6 * 5 * 5) ** -0.5
    p["conv2_w"] = _uniform(ks[2], (16, 150), bc2).astype(_MM_DTYPE)
    p["conv2_b"] = _uniform(ks[3], (16, 1), bc2)

    def fc(kw_, kb_, din, dout, din_pad, dout_pad):
        b = din ** -0.5
        w = jnp.pad(_uniform(kw_, (din, dout), b),
                    ((0, din_pad - din), (0, dout_pad - dout)))
        bias = jnp.pad(_uniform(kb_, (1, dout), b),
                       ((0, 0), (0, dout_pad - dout)))
        return w.astype(_MM_DTYPE), bias

    p["fc1_w"], p["fc1_b"] = fc(ks[4], ks[5], 400, 120, 400, 128)
    p["fc2_w"], p["fc2_b"] = fc(ks[6], ks[7], 120, 84, 128, 128)
    p["fc3_w"], p["fc3_b"] = fc(ks[8], ks[9], 84, 10, 128, 128)
    return p


# ---------------------------------------------------------------------------
# LeNet forward
# ---------------------------------------------------------------------------

def lenet_forward(params, x):
    """x: [B, 1, 28, 28] float32 -> (feat [B, 84], logits [B, 10]) float32."""
    B = x.shape[0]
    # One common batch block for BOTH conv stages: 128 images gives lane
    # widths 128*196 and 128*25 (exact multiples of 128) and keeps per-step
    # VMEM ~11 MiB (double-buffered bf16 patches) -- safe on v5e..v7x.
    # Small batches run as a single full-extent block (always legal).
    if B >= _CONV_BLOCK_B:
        Bblk = _CONV_BLOCK_B
        Bpad = _round_up(B, Bblk)
    else:
        Bblk, Bpad = B, B
    nb = Bpad // Bblk
    if Bpad != B:
        x = jnp.pad(x, ((0, Bpad - B), (0, 0), (0, 0), (0, 0)))
    # Block-major layout [nb, C, Bblk, H, W]: im2col for both convs needs no
    # transposes afterwards (only this tiny raw-input rearrangement).
    xb = x.reshape(nb, Bblk, 1, 28, 28).transpose(0, 2, 1, 3, 4)

    h = conv2d_relu_pool_blocked(xb, params["conv1_w"], params["conv1_b"],
                                 kh=5, kw=5, padding=2)   # [nb, 6, Bblk, 14, 14]
    h = conv2d_relu_pool_blocked(h, params["conv2_w"], params["conv2_b"],
                                 kh=5, kw=5, padding=0)   # [nb, 16, Bblk, 5, 5]
    # Flatten per image in torch .view order (c, h, w).
    h = h.transpose(0, 2, 1, 3, 4).reshape(Bpad, 16 * 5 * 5)

    feat, logits = fc_head(h[:B],
                           params["fc1_w"], params["fc1_b"],
                           params["fc2_w"], params["fc2_b"],
                           params["fc3_w"], params["fc3_b"])
    return feat[:, :84], logits[:, :10]


if __name__ == "__main__":
    key = jax.random.PRNGKey(0)
    pkey, xkey = jax.random.split(key)

    params = init_lenet_params(pkey)
    # LeNet's fc1 (400 = 16*5*5) implies 28x28 single-channel input (MNIST-size).
    x = jax.random.normal(xkey, (2, 1, 28, 28), jnp.float32)

    feat, logits = jax.jit(lenet_forward)(params, x)
    jax.block_until_ready((feat, logits))

    assert feat.shape == (2, 84) and logits.shape == (2, 10)
    assert feat.dtype == jnp.float32 and logits.dtype == jnp.float32
    assert bool(jnp.all(jnp.isfinite(feat))) and bool(jnp.all(jnp.isfinite(logits)))
    print("KERNEL_OK")
</pallas_src>

<mosaic_0001>
module attributes {stable_mosaic.version = 11 : i64} {
  func.func @_conv_relu_pool_kernel(%arg0: i32, %arg1: memref<1x4x25x392xbf16, #tpu.memory_space<vmem>>, %arg2: memref<6x25xbf16, #tpu.memory_space<vmem>>, %arg3: memref<6x1xf32, #tpu.memory_space<vmem>>, %arg4: memref<1x6x392xf32, #tpu.memory_space<vmem>>) attributes {dimension_semantics = [#tpu.dimension_semantics<parallel>], iteration_bounds = array<i64: 1>, scalar_prefetch = 0 : i64, scratch_operands = 0 : i64, tpu.core_type = #tpu.core_type<tc>, window_params = [{transform_indices = @transform_0, window_bounds = array<i64: 1, 4, 25, 392>}, {pipeline_mode = #tpu.pipeline_mode<synchronous>, transform_indices = @transform_1, window_bounds = array<i64: 6, 25>}, {pipeline_mode = #tpu.pipeline_mode<synchronous>, transform_indices = @transform_2, window_bounds = array<i64: 6, 1>}, {transform_indices = @transform_3, window_bounds = array<i64: 1, 6, 392>}]} {
    %c0 = arith.constant 0 : index
    %c0_0 = arith.constant 0 : index
    %0 = vector.load %arg2[%c0, %c0_0] : memref<6x25xbf16, #tpu.memory_space<vmem>>, vector<6x25xbf16>
    %c0_1 = arith.constant 0 : index
    %c0_2 = arith.constant 0 : index
    %c0_3 = arith.constant 0 : index
    %c0_4 = arith.constant 0 : index
    %1 = vector.load %arg1[%c0_1, %c0_2, %c0_3, %c0_4] : memref<1x4x25x392xbf16, #tpu.memory_space<vmem>>, vector<1x1x25x392xbf16>
    %2 = vector.shape_cast %1 : vector<1x1x25x392xbf16> to vector<25x392xbf16>
    %cst = arith.constant dense<0.000000e+00> : vector<6x392xf32>
    %3 = tpu.matmul %0, %2, %cst {dimension_numbers = #tpu.dot_dimension_numbers<[1], [0], [0], [1], [0, 0, 1, 1], [], []>} : vector<6x25xbf16>, vector<25x392xbf16>, vector<6x392xf32> -> vector<6x392xf32>
    %c0_5 = arith.constant 0 : index
    %c0_6 = arith.constant 0 : index
    %c0_7 = arith.constant 0 : index
    %4 = vector.load %arg4[%c0_5, %c0_6, %c0_7] : memref<1x6x392xf32, #tpu.memory_space<vmem>>, vector<1x6x392xf32>
    %5 = vector.shape_cast %4 : vector<1x6x392xf32> to vector<6x392xf32>
    %6 = vector.shape_cast %3 : vector<6x392xf32> to vector<1x6x392xf32>
    tpu.vector_store %arg4[%c0_5, %c0_6, %c0_7], %6 {strides = array<i32>} : memref<1x6x392xf32, #tpu.memory_space<vmem>>, vector<1x6x392xf32>,
    %c0_8 = arith.constant 0 : index
    %c0_9 = arith.constant 0 : index
    %c0_10 = arith.constant 0 : index
    %7 = vector.load %arg4[%c0_8, %c0_9, %c0_10] : memref<1x6x392xf32, #tpu.memory_space<vmem>>, vector<1x6x392xf32>
    %8 = vector.shape_cast %7 : vector<1x6x392xf32> to vector<6x392xf32>
    %c0_11 = arith.constant 0 : index
    %c1 = arith.constant 1 : index
    %c0_12 = arith.constant 0 : index
    %c0_13 = arith.constant 0 : index
    %9 = vector.load %arg1[%c0_11, %c1, %c0_12, %c0_13] : memref<1x4x25x392xbf16, #tpu.memory_space<vmem>>, vector<1x1x25x392xbf16>
    %10 = vector.shape_cast %9 : vector<1x1x25x392xbf16> to vector<25x392xbf16>
    %cst_14 = arith.constant dense<0.000000e+00> : vector<6x392xf32>
    %11 = tpu.matmul %0, %10, %cst_14 {dimension_numbers = #tpu.dot_dimension_numbers<[1], [0], [0], [1], [0, 0, 1, 1], [], []>} : vector<6x25xbf16>, vector<25x392xbf16>, vector<6x392xf32> -> vector<6x392xf32>
    %12 = arith.maximumf %8, %11 : vector<6x392xf32>
    %c0_15 = arith.constant 0 : index
    %c0_16 = arith.constant 0 : index
    %c0_17 = arith.constant 0 : index
    %13 = vector.load %arg4[%c0_15, %c0_16, %c0_17] : memref<1x6x392xf32, #tpu.memory_space<vmem>>, vector<1x6x392xf32>
    %14 = vector.shape_cast %13 : vector<1x6x392xf32> to vector<6x392xf32>
    %15 = vector.shape_cast %12 : vector<6x392xf32> to vector<1x6x392xf32>
    tpu.vector_store %arg4[%c0_15, %c0_16, %c0_17], %15 {strides = array<i32>} : memref<1x6x392xf32, #tpu.memory_space<vmem>>, vector<1x6x392xf32>,
    %c0_18 = arith.constant 0 : index
    %c0_19 = arith.constant 0 : index
    %c0_20 = arith.constant 0 : index
    %16 = vector.load %arg4[%c0_18, %c0_19, %c0_20] : memref<1x6x392xf32, #tpu.memory_space<vmem>>, vector<1x6x392xf32>
    %17 = vector.shape_cast %16 : vector<1x6x392xf32> to vector<6x392xf32>
    %c0_21 = arith.constant 0 : index
    %c2 = arith.constant 2 : index
    %c0_22 = arith.constant 0 : index
    %c0_23 = arith.constant 0 : index
    %18 = vector.load %arg1[%c0_21, %c2, %c0_22, %c0_23] : memref<1x4x25x392xbf16, #tpu.memory_space<vmem>>, vector<1x1x25x392xbf16>
    %19 = vector.shape_cast %18 : vector<1x1x25x392xbf16> to vector<25x392xbf16>
    %cst_24 = arith.constant dense<0.000000e+00> : vector<6x392xf32>
    %20 = tpu.matmul %0, %19, %cst_24 {dimension_numbers = #tpu.dot_dimension_numbers<[1], [0], [0], [1], [0, 0, 1, 1], [], []>} : vector<6x25xbf16>, vector<25x392xbf16>, vector<6x392xf32> -> vector<6x392xf32>
    %21 = arith.maximumf %17, %20 : vector<6x392xf32>
    %c0_25 = arith.constant 0 : index
    %c0_26 = arith.constant 0 : index
    %c0_27 = arith.constant 0 : index
    %22 = vector.load %arg4[%c0_25, %c0_26, %c0_27] : memref<1x6x392xf32, #tpu.memory_space<vmem>>, vector<1x6x392xf32>
    %23 = vector.shape_cast %22 : vector<1x6x392xf32> to vector<6x392xf32>
    %24 = vector.shape_cast %21 : vector<6x392xf32> to vector<1x6x392xf32>
    tpu.vector_store %arg4[%c0_25, %c0_26, %c0_27], %24 {strides = array<i32>} : memref<1x6x392xf32, #tpu.memory_space<vmem>>, vector<1x6x392xf32>,
    %c0_28 = arith.constant 0 : index
    %c0_29 = arith.constant 0 : index
    %c0_30 = arith.constant 0 : index
    %25 = vector.load %arg4[%c0_28, %c0_29, %c0_30] : memref<1x6x392xf32, #tpu.memory_space<vmem>>, vector<1x6x392xf32>
    %26 = vector.shape_cast %25 : vector<1x6x392xf32> to vector<6x392xf32>
    %c0_31 = arith.constant 0 : index
    %c3 = arith.constant 3 : index
    %c0_32 = arith.constant 0 : index
    %c0_33 = arith.constant 0 : index
    %27 = vector.load %arg1[%c0_31, %c3, %c0_32, %c0_33] : memref<1x4x25x392xbf16, #tpu.memory_space<vmem>>, vector<1x1x25x392xbf16>
    %28 = vector.shape_cast %27 : vector<1x1x25x392xbf16> to vector<25x392xbf16>
    %cst_34 = arith.constant dense<0.000000e+00> : vector<6x392xf32>
    %29 = tpu.matmul %0, %28, %cst_34 {dimension_numbers = #tpu.dot_dimension_numbers<[1], [0], [0], [1], [0, 0, 1, 1], [], []>} : vector<6x25xbf16>, vector<25x392xbf16>, vector<6x392xf32> -> vector<6x392xf32>
    %30 = arith.maximumf %26, %29 : vector<6x392xf32>
    %c0_35 = arith.constant 0 : index
    %c0_36 = arith.constant 0 : index
    %c0_37 = arith.constant 0 : index
    %31 = vector.load %arg4[%c0_35, %c0_36, %c0_37] : memref<1x6x392xf32, #tpu.memory_space<vmem>>, vector<1x6x392xf32>
    %32 = vector.shape_cast %31 : vector<1x6x392xf32> to vector<6x392xf32>
    %33 = vector.shape_cast %30 : vector<6x392xf32> to vector<1x6x392xf32>
    tpu.vector_store %arg4[%c0_35, %c0_36, %c0_37], %33 {strides = array<i32>} : memref<1x6x392xf32, #tpu.memory_space<vmem>>, vector<1x6x392xf32>,
    %c0_38 = arith.constant 0 : index
    %c0_39 = arith.constant 0 : index
    %c0_40 = arith.constant 0 : index
    %34 = vector.load %arg4[%c0_38, %c0_39, %c0_40] : memref<1x6x392xf32, #tpu.memory_space<vmem>>, vector<1x6x392xf32>
    %35 = vector.shape_cast %34 : vector<1x6x392xf32> to vector<6x392xf32>
    %c0_41 = arith.constant 0 : index
    %c0_42 = arith.constant 0 : index
    %36 = vector.load %arg3[%c0_41, %c0_42] : memref<6x1xf32, #tpu.memory_space<vmem>>, vector<6x1xf32>
    %37 = vector.broadcast %36 : vector<6x1xf32> to vector<6x392xf32>
    %38 = arith.addf %35, %37 : vector<6x392xf32>
    %cst_43 = arith.constant 0.000000e+00 : f32
    %39 = vector.broadcast %cst_43 : f32 to vector<6x392xf32>
    %40 = arith.maximumf %38, %39 : vector<6x392xf32>
    %c0_44 = arith.constant 0 : index
    %c0_45 = arith.constant 0 : index
    %c0_46 = arith.constant 0 : index
    %41 = vector.load %arg4[%c0_44, %c0_45, %c0_46] : memref<1x6x392xf32, #tpu.memory_space<vmem>>, vector<1x6x392xf32>
    %42 = vector.shape_cast %41 : vector<1x6x392xf32> to vector<6x392xf32>
    %43 = vector.shape_cast %40 : vector<6x392xf32> to vector<1x6x392xf32>
    tpu.vector_store %arg4[%c0_44, %c0_45, %c0_46], %43 {strides = array<i32>} : memref<1x6x392xf32, #tpu.memory_space<vmem>>, vector<1x6x392xf32>,
    return
  }
  func.func @transform_0(%arg0: i32) -> (i32, i32, i32, i32) {
    %c0_i32 = arith.constant 0 : i32
    %c0_i32_0 = arith.constant 0 : i32
    %c0_i32_1 = arith.constant 0 : i32
    %c0_i32_2 = arith.constant 0 : i32
    return %arg0, %c0_i32, %c0_i32_0, %c0_i32_1 : i32, i32, i32, i32
  }
  func.func @transform_1(%arg0: i32) -> (i32, i32) {
    %c0_i32 = arith.constant 0 : i32
    %c0_i32_0 = arith.constant 0 : i32
    %c0_i32_1 = arith.constant 0 : i32
    return %c0_i32, %c0_i32_0 : i32, i32
  }
  func.func @transform_2(%arg0: i32) -> (i32, i32) {
    %c0_i32 = arith.constant 0 : i32
    %c0_i32_0 = arith.constant 0 : i32
    %c0_i32_1 = arith.constant 0 : i32
    return %c0_i32, %c0_i32_0 : i32, i32
  }
  func.func @transform_3(%arg0: i32) -> (i32, i32, i32) {
    %c0_i32 = arith.constant 0 : i32
    %c0_i32_0 = arith.constant 0 : i32
    %c0_i32_1 = arith.constant 0 : i32
    return %arg0, %c0_i32, %c0_i32_0 : i32, i32, i32
  }
}

module attributes {stable_mosaic.version = 11 : i64} {
  func.func @_conv_relu_pool_kernel(%arg0: i32, %arg1: memref<1x4x150x50xbf16, #tpu.memory_space<vmem>>, %arg2: memref<16x150xbf16, #tpu.memory_space<vmem>>, %arg3: memref<16x1xf32, #tpu.memory_space<vmem>>, %arg4: memref<1x16x50xf32, #tpu.memory_space<vmem>>) attributes {dimension_semantics = [#tpu.dimension_semantics<parallel>], iteration_bounds = array<i64: 1>, scalar_prefetch = 0 : i64, scratch_operands = 0 : i64, tpu.core_type = #tpu.core_type<tc>, window_params = [{transform_indices = @transform_0, window_bounds = array<i64: 1, 4, 150, 50>}, {pipeline_mode = #tpu.pipeline_mode<synchronous>, transform_indices = @transform_1, window_bounds = array<i64: 16, 150>}, {pipeline_mode = #tpu.pipeline_mode<synchronous>, transform_indices = @transform_2, window_bounds = array<i64: 16, 1>}, {transform_indices = @transform_3, window_bounds = array<i64: 1, 16, 50>}]} {
    %c0 = arith.constant 0 : index
    %c0_0 = arith.constant 0 : index
    %0 = vector.load %arg2[%c0, %c0_0] : memref<16x150xbf16, #tpu.memory_space<vmem>>, vector<16x150xbf16>
    %c0_1 = arith.constant 0 : index
    %c0_2 = arith.constant 0 : index
    %c0_3 = arith.constant 0 : index
    %c0_4 = arith.constant 0 : index
    %1 = vector.load %arg1[%c0_1, %c0_2, %c0_3, %c0_4] : memref<1x4x150x50xbf16, #tpu.memory_space<vmem>>, vector<1x1x150x50xbf16>
    %2 = vector.shape_cast %1 : vector<1x1x150x50xbf16> to vector<150x50xbf16>
    %cst = arith.constant dense<0.000000e+00> : vector<16x50xf32>
    %3 = tpu.matmul %0, %2, %cst {dimension_numbers = #tpu.dot_dimension_numbers<[1], [0], [0], [1], [0, 0, 1, 1], [], []>} : vector<16x150xbf16>, vector<150x50xbf16>, vector<16x50xf32> -> vector<16x50xf32>
    %c0_5 = arith.constant 0 : index
    %c0_6 = arith.constant 0 : index
    %c0_7 = arith.constant 0 : index
    %4 = vector.load %arg4[%c0_5, %c0_6, %c0_7] : memref<1x16x50xf32, #tpu.memory_space<vmem>>, vector<1x16x50xf32>
    %5 = vector.shape_cast %4 : vector<1x16x50xf32> to vector<16x50xf32>
    %6 = vector.shape_cast %3 : vector<16x50xf32> to vector<1x16x50xf32>
    tpu.vector_store %arg4[%c0_5, %c0_6, %c0_7], %6 {strides = array<i32>} : memref<1x16x50xf32, #tpu.memory_space<vmem>>, vector<1x16x50xf32>,
    %c0_8 = arith.constant 0 : index
    %c0_9 = arith.constant 0 : index
    %c0_10 = arith.constant 0 : index
    %7 = vector.load %arg4[%c0_8, %c0_9, %c0_10] : memref<1x16x50xf32, #tpu.memory_space<vmem>>, vector<1x16x50xf32>
    %8 = vector.shape_cast %7 : vector<1x16x50xf32> to vector<16x50xf32>
    %c0_11 = arith.constant 0 : index
    %c1 = arith.constant 1 : index
    %c0_12 = arith.constant 0 : index
    %c0_13 = arith.constant 0 : index
    %9 = vector.load %arg1[%c0_11, %c1, %c0_12, %c0_13] : memref<1x4x150x50xbf16, #tpu.memory_space<vmem>>, vector<1x1x150x50xbf16>
    %10 = vector.shape_cast %9 : vector<1x1x150x50xbf16> to vector<150x50xbf16>
    %cst_14 = arith.constant dense<0.000000e+00> : vector<16x50xf32>
    %11 = tpu.matmul %0, %10, %cst_14 {dimension_numbers = #tpu.dot_dimension_numbers<[1], [0], [0], [1], [0, 0, 1, 1], [], []>} : vector<16x150xbf16>, vector<150x50xbf16>, vector<16x50xf32> -> vector<16x50xf32>
    %12 = arith.maximumf %8, %11 : vector<16x50xf32>
    %c0_15 = arith.constant 0 : index
    %c0_16 = arith.constant 0 : index
    %c0_17 = arith.constant 0 : index
    %13 = vector.load %arg4[%c0_15, %c0_16, %c0_17] : memref<1x16x50xf32, #tpu.memory_space<vmem>>, vector<1x16x50xf32>
    %14 = vector.shape_cast %13 : vector<1x16x50xf32> to vector<16x50xf32>
    %15 = vector.shape_cast %12 : vector<16x50xf32> to vector<1x16x50xf32>
    tpu.vector_store %arg4[%c0_15, %c0_16, %c0_17], %15 {strides = array<i32>} : memref<1x16x50xf32, #tpu.memory_space<vmem>>, vector<1x16x50xf32>,
    %c0_18 = arith.constant 0 : index
    %c0_19 = arith.constant 0 : index
    %c0_20 = arith.constant 0 : index
    %16 = vector.load %arg4[%c0_18, %c0_19, %c0_20] : memref<1x16x50xf32, #tpu.memory_space<vmem>>, vector<1x16x50xf32>
    %17 = vector.shape_cast %16 : vector<1x16x50xf32> to vector<16x50xf32>
    %c0_21 = arith.constant 0 : index
    %c2 = arith.constant 2 : index
    %c0_22 = arith.constant 0 : index
    %c0_23 = arith.constant 0 : index
    %18 = vector.load %arg1[%c0_21, %c2, %c0_22, %c0_23] : memref<1x4x150x50xbf16, #tpu.memory_space<vmem>>, vector<1x1x150x50xbf16>
    %19 = vector.shape_cast %18 : vector<1x1x150x50xbf16> to vector<150x50xbf16>
    %cst_24 = arith.constant dense<0.000000e+00> : vector<16x50xf32>
    %20 = tpu.matmul %0, %19, %cst_24 {dimension_numbers = #tpu.dot_dimension_numbers<[1], [0], [0], [1], [0, 0, 1, 1], [], []>} : vector<16x150xbf16>, vector<150x50xbf16>, vector<16x50xf32> -> vector<16x50xf32>
    %21 = arith.maximumf %17, %20 : vector<16x50xf32>
    %c0_25 = arith.constant 0 : index
    %c0_26 = arith.constant 0 : index
    %c0_27 = arith.constant 0 : index
    %22 = vector.load %arg4[%c0_25, %c0_26, %c0_27] : memref<1x16x50xf32, #tpu.memory_space<vmem>>, vector<1x16x50xf32>
    %23 = vector.shape_cast %22 : vector<1x16x50xf32> to vector<16x50xf32>
    %24 = vector.shape_cast %21 : vector<16x50xf32> to vector<1x16x50xf32>
    tpu.vector_store %arg4[%c0_25, %c0_26, %c0_27], %24 {strides = array<i32>} : memref<1x16x50xf32, #tpu.memory_space<vmem>>, vector<1x16x50xf32>,
    %c0_28 = arith.constant 0 : index
    %c0_29 = arith.constant 0 : index
    %c0_30 = arith.constant 0 : index
    %25 = vector.load %arg4[%c0_28, %c0_29, %c0_30] : memref<1x16x50xf32, #tpu.memory_space<vmem>>, vector<1x16x50xf32>
    %26 = vector.shape_cast %25 : vector<1x16x50xf32> to vector<16x50xf32>
    %c0_31 = arith.constant 0 : index
    %c3 = arith.constant 3 : index
    %c0_32 = arith.constant 0 : index
    %c0_33 = arith.constant 0 : index
    %27 = vector.load %arg1[%c0_31, %c3, %c0_32, %c0_33] : memref<1x4x150x50xbf16, #tpu.memory_space<vmem>>, vector<1x1x150x50xbf16>
    %28 = vector.shape_cast %27 : vector<1x1x150x50xbf16> to vector<150x50xbf16>
    %cst_34 = arith.constant dense<0.000000e+00> : vector<16x50xf32>
    %29 = tpu.matmul %0, %28, %cst_34 {dimension_numbers = #tpu.dot_dimension_numbers<[1], [0], [0], [1], [0, 0, 1, 1], [], []>} : vector<16x150xbf16>, vector<150x50xbf16>, vector<16x50xf32> -> vector<16x50xf32>
    %30 = arith.maximumf %26, %29 : vector<16x50xf32>
    %c0_35 = arith.constant 0 : index
    %c0_36 = arith.constant 0 : index
    %c0_37 = arith.constant 0 : index
    %31 = vector.load %arg4[%c0_35, %c0_36, %c0_37] : memref<1x16x50xf32, #tpu.memory_space<vmem>>, vector<1x16x50xf32>
    %32 = vector.shape_cast %31 : vector<1x16x50xf32> to vector<16x50xf32>
    %33 = vector.shape_cast %30 : vector<16x50xf32> to vector<1x16x50xf32>
    tpu.vector_store %arg4[%c0_35, %c0_36, %c0_37], %33 {strides = array<i32>} : memref<1x16x50xf32, #tpu.memory_space<vmem>>, vector<1x16x50xf32>,
    %c0_38 = arith.constant 0 : index
    %c0_39 = arith.constant 0 : index
    %c0_40 = arith.constant 0 : index
    %34 = vector.load %arg4[%c0_38, %c0_39, %c0_40] : memref<1x16x50xf32, #tpu.memory_space<vmem>>, vector<1x16x50xf32>
    %35 = vector.shape_cast %34 : vector<1x16x50xf32> to vector<16x50xf32>
    %c0_41 = arith.constant 0 : index
    %c0_42 = arith.constant 0 : index
    %36 = vector.load %arg3[%c0_41, %c0_42] : memref<16x1xf32, #tpu.memory_space<vmem>>, vector<16x1xf32>
    %37 = vector.broadcast %36 : vector<16x1xf32> to vector<16x50xf32>
    %38 = arith.addf %35, %37 : vector<16x50xf32>
    %cst_43 = arith.constant 0.000000e+00 : f32
    %39 = vector.broadcast %cst_43 : f32 to vector<16x50xf32>
    %40 = arith.maximumf %38, %39 : vector<16x50xf32>
    %c0_44 = arith.constant 0 : index
    %c0_45 = arith.constant 0 : index
    %c0_46 = arith.constant 0 : index
    %41 = vector.load %arg4[%c0_44, %c0_45, %c0_46] : memref<1x16x50xf32, #tpu.memory_space<vmem>>, vector<1x16x50xf32>
    %42 = vector.shape_cast %41 : vector<1x16x50xf32> to vector<16x50xf32>
    %43 = vector.shape_cast %40 : vector<16x50xf32> to vector<1x16x50xf32>
    tpu.vector_store %arg4[%c0_44, %c0_45, %c0_46], %43 {strides = array<i32>} : memref<1x16x50xf32, #tpu.memory_space<vmem>>, vector<1x16x50xf32>,
    return
  }
  func.func @transform_0(%arg0: i32) -> (i32, i32, i32, i32) {
    %c0_i32 = arith.constant 0 : i32
    %c0_i32_0 = arith.constant 0 : i32
    %c0_i32_1 = arith.constant 0 : i32
    %c0_i32_2 = arith.constant 0 : i32
    return %arg0, %c0_i32, %c0_i32_0, %c0_i32_1 : i32, i32, i32, i32
  }
  func.func @transform_1(%arg0: i32) -> (i32, i32) {
    %c0_i32 = arith.constant 0 : i32
    %c0_i32_0 = arith.constant 0 : i32
    %c0_i32_1 = arith.constant 0 : i32
    return %c0_i32, %c0_i32_0 : i32, i32
  }
  func.func @transform_2(%arg0: i32) -> (i32, i32) {
    %c0_i32 = arith.constant 0 : i32
    %c0_i32_0 = arith.constant 0 : i32
    %c0_i32_1 = arith.constant 0 : i32
    return %c0_i32, %c0_i32_0 : i32, i32
  }
  func.func @transform_3(%arg0: i32) -> (i32, i32, i32) {
    %c0_i32 = arith.constant 0 : i32
    %c0_i32_0 = arith.constant 0 : i32
    %c0_i32_1 = arith.constant 0 : i32
    return %arg0, %c0_i32, %c0_i32_0 : i32, i32, i32
  }
}

module attributes {stable_mosaic.version = 11 : i64} {
  func.func @_fc_fused_kernel(%arg0: i32, %arg1: memref<8x400xbf16, #tpu.memory_space<vmem>>, %arg2: memref<400x128xbf16, #tpu.memory_space<vmem>>, %arg3: memref<1x128xf32, #tpu.memory_space<vmem>>, %arg4: memref<128x128xbf16, #tpu.memory_space<vmem>>, %arg5: memref<1x128xf32, #tpu.memory_space<vmem>>, %arg6: memref<128x128xbf16, #tpu.memory_space<vmem>>, %arg7: memref<1x128xf32, #tpu.memory_space<vmem>>, %arg8: memref<8x128xf32, #tpu.memory_space<vmem>>, %arg9: memref<8x128xf32, #tpu.memory_space<vmem>>) attributes {dimension_semantics = [#tpu.dimension_semantics<parallel>], iteration_bounds = array<i64: 1>, scalar_prefetch = 0 : i64, scratch_operands = 0 : i64, tpu.core_type = #tpu.core_type<tc>, window_params = [{transform_indices = @transform_0, window_bounds = array<i64: 8, 400>}, {pipeline_mode = #tpu.pipeline_mode<synchronous>, transform_indices = @transform_1, window_bounds = array<i64: 400, 128>}, {pipeline_mode = #tpu.pipeline_mode<synchronous>, transform_indices = @transform_2, window_bounds = array<i64: 1, 128>}, {pipeline_mode = #tpu.pipeline_mode<synchronous>, transform_indices = @transform_3, window_bounds = array<i64: 128, 128>}, {pipeline_mode = #tpu.pipeline_mode<synchronous>, transform_indices = @transform_4, window_bounds = array<i64: 1, 128>}, {pipeline_mode = #tpu.pipeline_mode<synchronous>, transform_indices = @transform_5, window_bounds = array<i64: 128, 128>}, {pipeline_mode = #tpu.pipeline_mode<synchronous>, transform_indices = @transform_6, window_bounds = array<i64: 1, 128>}, {transform_indices = @transform_7, window_bounds = array<i64: 8, 128>}, {transform_indices = @transform_8, window_bounds = array<i64: 8, 128>}]} {
    %c0 = arith.constant 0 : index
    %c0_0 = arith.constant 0 : index
    %0 = vector.load %arg1[%c0, %c0_0] : memref<8x400xbf16, #tpu.memory_space<vmem>>, vector<8x400xbf16>
    %c0_1 = arith.constant 0 : index
    %c0_2 = arith.constant 0 : index
    %1 = vector.load %arg2[%c0_1, %c0_2] : memref<400x128xbf16, #tpu.memory_space<vmem>>, vector<400x128xbf16>
    %cst = arith.constant dense<0.000000e+00> : vector<8x128xf32>
    %2 = tpu.matmul %0, %1, %cst {dimension_numbers = #tpu.dot_dimension_numbers<[1], [0], [0], [1], [0, 0, 1, 1], [], []>} : vector<8x400xbf16>, vector<400x128xbf16>, vector<8x128xf32> -> vector<8x128xf32>
    %c0_3 = arith.constant 0 : index
    %c0_4 = arith.constant 0 : index
    %3 = vector.load %arg3[%c0_3, %c0_4] : memref<1x128xf32, #tpu.memory_space<vmem>>, vector<1x128xf32>
    %4 = vector.broadcast %3 : vector<1x128xf32> to vector<8x128xf32>
    %5 = arith.addf %2, %4 : vector<8x128xf32>
    %cst_5 = arith.constant 0.000000e+00 : f32
    %6 = vector.broadcast %cst_5 : f32 to vector<8x128xf32>
    %7 = arith.maximumf %5, %6 : vector<8x128xf32>
    %8 = arith.truncf %7 : vector<8x128xf32> to vector<8x128xbf16>
    %c0_6 = arith.constant 0 : index
    %c0_7 = arith.constant 0 : index
    %9 = vector.load %arg4[%c0_6, %c0_7] : memref<128x128xbf16, #tpu.memory_space<vmem>>, vector<128x128xbf16>
    %cst_8 = arith.constant dense<0.000000e+00> : vector<8x128xf32>
    %10 = tpu.matmul %8, %9, %cst_8 {dimension_numbers = #tpu.dot_dimension_numbers<[1], [0], [0], [1], [0, 0, 1, 1], [], []>} : vector<8x128xbf16>, vector<128x128xbf16>, vector<8x128xf32> -> vector<8x128xf32>
    %c0_9 = arith.constant 0 : index
    %c0_10 = arith.constant 0 : index
    %11 = vector.load %arg5[%c0_9, %c0_10] : memref<1x128xf32, #tpu.memory_space<vmem>>, vector<1x128xf32>
    %12 = vector.broadcast %11 : vector<1x128xf32> to vector<8x128xf32>
    %13 = arith.addf %10, %12 : vector<8x128xf32>
    %cst_11 = arith.constant 0.000000e+00 : f32
    %14 = vector.broadcast %cst_11 : f32 to vector<8x128xf32>
    %15 = arith.maximumf %13, %14 : vector<8x128xf32>
    %c0_12 = arith.constant 0 : index
    %c0_13 = arith.constant 0 : index
    %16 = vector.load %arg8[%c0_12, %c0_13] : memref<8x128xf32, #tpu.memory_space<vmem>>, vector<8x128xf32>
    tpu.vector_store %arg8[%c0_12, %c0_13], %15 {strides = array<i32>} : memref<8x128xf32, #tpu.memory_space<vmem>>, vector<8x128xf32>,
    %17 = arith.truncf %15 : vector<8x128xf32> to vector<8x128xbf16>
    %c0_14 = arith.constant 0 : index
    %c0_15 = arith.constant 0 : index
    %18 = vector.load %arg6[%c0_14, %c0_15] : memref<128x128xbf16, #tpu.memory_space<vmem>>, vector<128x128xbf16>
    %cst_16 = arith.constant dense<0.000000e+00> : vector<8x128xf32>
    %19 = tpu.matmul %17, %18, %cst_16 {dimension_numbers = #tpu.dot_dimension_numbers<[1], [0], [0], [1], [0, 0, 1, 1], [], []>} : vector<8x128xbf16>, vector<128x128xbf16>, vector<8x128xf32> -> vector<8x128xf32>
    %c0_17 = arith.constant 0 : index
    %c0_18 = arith.constant 0 : index
    %20 = vector.load %arg7[%c0_17, %c0_18] : memref<1x128xf32, #tpu.memory_space<vmem>>, vector<1x128xf32>
    %21 = vector.broadcast %20 : vector<1x128xf32> to vector<8x128xf32>
    %22 = arith.addf %19, %21 : vector<8x128xf32>
    %c0_19 = arith.constant 0 : index
    %c0_20 = arith.constant 0 : index
    %23 = vector.load %arg9[%c0_19, %c0_20] : memref<8x128xf32, #tpu.memory_space<vmem>>, vector<8x128xf32>
    tpu.vector_store %arg9[%c0_19, %c0_20], %22 {strides = array<i32>} : memref<8x128xf32, #tpu.memory_space<vmem>>, vector<8x128xf32>,
    return
  }
  func.func @transform_0(%arg0: i32) -> (i32, i32) {
    %c0_i32 = arith.constant 0 : i32
    %c0_i32_0 = arith.constant 0 : i32
    return %arg0, %c0_i32 : i32, i32
  }
  func.func @transform_1(%arg0: i32) -> (i32, i32) {
    %c0_i32 = arith.constant 0 : i32
    %c0_i32_0 = arith.constant 0 : i32
    %c0_i32_1 = arith.constant 0 : i32
    return %c0_i32, %c0_i32_0 : i32, i32
  }
  func.func @transform_2(%arg0: i32) -> (i32, i32) {
    %c0_i32 = arith.constant 0 : i32
    %c0_i32_0 = arith.constant 0 : i32
    %c0_i32_1 = arith.constant 0 : i32
    return %c0_i32, %c0_i32_0 : i32, i32
  }
  func.func @transform_3(%arg0: i32) -> (i32, i32) {
    %c0_i32 = arith.constant 0 : i32
    %c0_i32_0 = arith.constant 0 : i32
    %c0_i32_1 = arith.constant 0 : i32
    return %c0_i32, %c0_i32_0 : i32, i32
  }
  func.func @transform_4(%arg0: i32) -> (i32, i32) {
    %c0_i32 = arith.constant 0 : i32
    %c0_i32_0 = arith.constant 0 : i32
    %c0_i32_1 = arith.constant 0 : i32
    return %c0_i32, %c0_i32_0 : i32, i32
  }
  func.func @transform_5(%arg0: i32) -> (i32, i32) {
    %c0_i32 = arith.constant 0 : i32
    %c0_i32_0 = arith.constant 0 : i32
    %c0_i32_1 = arith.constant 0 : i32
    return %c0_i32, %c0_i32_0 : i32, i32
  }
  func.func @transform_6(%arg0: i32) -> (i32, i32) {
    %c0_i32 = arith.constant 0 : i32
    %c0_i32_0 = arith.constant 0 : i32
    %c0_i32_1 = arith.constant 0 : i32
    return %c0_i32, %c0_i32_0 : i32, i32
  }
  func.func @transform_7(%arg0: i32) -> (i32, i32) {
    %c0_i32 = arith.constant 0 : i32
    %c0_i32_0 = arith.constant 0 : i32
    return %arg0, %c0_i32 : i32, i32
  }
  func.func @transform_8(%arg0: i32) -> (i32, i32) {
    %c0_i32 = arith.constant 0 : i32
    %c0_i32_0 = arith.constant 0 : i32
    return %arg0, %c0_i32 : i32, i32
  }
}

</mosaic_0001>

<llo_original>
// kernel: lenet_forward.3
$region0: #{lenet_forward.3}
  #allocation0 [shape = 'u32[]', space=smem, size = 0x4, offset = 0x4, fixed_abs, tag = 'smem constant byte address 0x4 - core index']
  #allocation1 [shape = 'u32[144,128]{1,0:T(1,128)}', space=vmem, size = 0x12000, scoped, tag = 'internal scratch']
  %s0 = inlined_call_operand.vmem [shape: bf16[1,4,25,392], index: 0, kind: input, shape index: {}]
  %s1 = inlined_call_operand.vmem [shape: bf16[6,25], index: 1, kind: input, shape index: {}]
  %s2 = inlined_call_operand.vmem [shape: f32[6,1], index: 2, kind: input, shape index: {}]
  %s3 = inlined_call_operand.vmem [shape: f32[1,6,392], index: 3, kind: output, shape index: {}]
  %s4 = sld [smem:[#allocation0]]
  $region22: #{lenet_forward.3} parent=0
    _
  %s6 = ssub.s32 1, %s4
  %s7 = scalar_select 0, %s6, %s4
  // Predicated region
  $region2: #{lenet_forward.3} parent=0 // pred_check
    _
  $region3: #{lenet_forward.3} parent=0 // pred_check_branch
    %9 = sbr.rel (0) target = $region5
  $region4: #{lenet_forward.3} parent=0 // pred_region
    _
  $region5: #{lenet_forward.3} parent=0 // pred_fallthru
    _
  // Predicated region
  $region6: #{lenet_forward.3} parent=0 // pred_check
    _
  $region7: #{lenet_forward.3} parent=0 // pred_check_branch
    %11 = sbr.rel (0) target = $region9
  $region8: #{lenet_forward.3} parent=0 // pred_region
    _
  $region9: #{lenet_forward.3} parent=0 // pred_fallthru
    _
  // Predicated region
  $region10: #{lenet_forward.3} parent=0 // pred_check
    _
  $region11: #{lenet_forward.3} parent=0 // pred_check_branch
    %13 = sbr.rel (0) target = $region13
  $region12: #{lenet_forward.3} parent=0 // pred_region
    _
  $region13: #{lenet_forward.3} parent=0 // pred_fallthru
    _
  %v15 = vld [vmem:[%s1] sm:$0x7]
  %v16 = vld [vmem:[%s0] sm:$0xff]
  %v17 = vld [vmem:[%s0 + $0x8] sm:$0xff]
  %v18 = vld [vmem:[%s0 + $0x10] sm:$0xff]
  %v19 = vld [vmem:[%s0 + $0x18] sm:$0xff]
  %v20 = vld [vmem:[%s0 + $0x20] sm:$0xff]
  %v21 = vld [vmem:[%s0 + $0x28] sm:$0xff]
  %v22 = vld [vmem:[%s0 + $0x30] sm:$0x11]
  %v23 = vld [vmem:[%s0 + $0x38] sm:$0x11]
  %v32 = vunpack.c.l.b16 %v16
  %v33 = vunpack.c.h.b16 %v16
  %v34 = vunpack.c.l.b16 %v17
  %v35 = vunpack.c.h.b16 %v17
  %v36 = vunpack.c.l.b16 %v18
  %v37 = vunpack.c.h.b16 %v18
  %v38 = vunpack.c.l.b16 %v19
  %v39 = vunpack.c.h.b16 %v19
  %v40 = vunpack.c.l.b16 %v20
  %v41 = vunpack.c.h.b16 %v20
  %v42 = vunpack.c.l.b16 %v21
  %v43 = vunpack.c.h.b16 %v21
  %v44 = vunpack.c.l.b16 %v22
  %v45 = vunpack.c.h.b16 %v22
  %v46 = vunpack.c.l.b16 %v23
  %v47 = vunpack.c.h.b16 %v23
  %v48 = vpack.c.b16 %v36, %v32
  %v49 = vpack.c.b16 %v37, %v33
  %v50 = vpack.c.b16 %v38, %v34
  %v51 = vpack.c.b16 %v39, %v35
  %v52 = vpack.c.b16 %v44, %v40
  %v53 = vpack.c.b16 %v45, %v41
  %v54 = vpack.c.b16 %v46, %v42
  %v55 = vpack.c.b16 %v47, %v43
  %vm60 = vcmask 203776
  %v62 = vsel %vm60, %v15, 0
  %vm64 = vcmask 1043456
  %vm65 = vcmask 1044480
  %v66 = vsel %vm64, 4294967295, 65535
  %v67 = vsel %vm65, %v66, 0
  %v69 = vand.u32 %v52, %v67
  %v72 = vand.u32 %v53, %v67
  %v75 = vand.u32 %v54, %v67
  %v78 = vand.u32 %v55, %v67
  %80 = vmatprep.subr.bf16.mxu0 0
  %81 = vmatpush1.bf16.msra.mxu0 0
  %82 = vmatprep.subr.bf16.mxu0 0
  %83 = vmatpush1.bf16.msra.mxu0 0
  %84 = vmatprep.subr.bf16.mxu0 0
  %85 = vmatpush1.bf16.msra.mxu0 0
  %86 = vmatprep.subr.bf16.mxu0 0
  %87 = vmatpush1.bf16.msra.mxu0 0
  %88 = vmatprep.subr.bf16.mxu0 0
  %89 = vmatpush1.bf16.msra.mxu0 0
  %90 = vmatprep.subr.bf16.mxu0 0
  %91 = vmatpush1.bf16.msra.mxu0 0
  %92 = vmatprep.subr.bf16.mxu0 %v72
  %93 = vmatpush1.bf16.msra.mxu0 %v69
  %94 = vmatprep.subr.bf16.mxu0 %v49
  %95 = vmatpush1.bf16.msra.mxu0 %v48
  %96 = vmatprep.subr.bf16.mxu0 0
  %97 = vmatpush2.bf16.msra.mxu0 0
  %98 = vmatprep.subr.bf16.mxu0 0
  %99 = vmatpush2.bf16.msra.mxu0 0
  %100 = vmatprep.subr.bf16.mxu0 0
  %101 = vmatpush2.bf16.msra.mxu0 0
  %102 = vmatprep.subr.bf16.mxu0 0
  %103 = vmatpush2.bf16.msra.mxu0 0
  %104 = vmatprep.subr.bf16.mxu0 0
  %105 = vmatpush2.bf16.msra.mxu0 0
  %106 = vmatprep.subr.bf16.mxu0 0
  %107 = vmatpush2.bf16.msra.mxu0 0
  %108 = vmatprep.subr.bf16.mxu0 0
  %109 = vmatpush2.bf16.msra.mxu0 0
  %110 = vmatprep.subr.bf16.mxu0 0
  %111 = vmatpush2.bf16.msra.mxu0 0
  %112 = vmatprep.mubr.bf16.mxu0 0
  %113 = vmatmul.mubr.bf16.gmra.mxu0 %v62
  %v114 = vpop.f32.mrf.mxu0
  %v115 = vadd.f32 0.0, %v114
  %v116 = vpop.f32.mrf.mxu0
  %v117 = vadd.f32 0.0, %v116
  %v118 = vpop.f32.mrf.mxu0
  %v119 = vpop.f32.mrf.mxu0
  %120 = vdwg.mxu0
  %121 = vmatprep.subr.bf16.mxu0 0
  %122 = vmatpush1.bf16.msra.mxu0 0
  %123 = vmatprep.subr.bf16.mxu0 0
  %124 = vmatpush1.bf16.msra.mxu0 0
  %125 = vmatprep.subr.bf16.mxu0 0
  %126 = vmatpush1.bf16.msra.mxu0 0
  %127 = vmatprep.subr.bf16.mxu0 0
  %128 = vmatpush1.bf16.msra.mxu0 0
  %129 = vmatprep.subr.bf16.mxu0 0
  %130 = vmatpush1.bf16.msra.mxu0 0
  %131 = vmatprep.subr.bf16.mxu0 0
  %132 = vmatpush1.bf16.msra.mxu0 0
  %133 = vmatprep.subr.bf16.mxu0 %v78
  %134 = vmatpush1.bf16.msra.mxu0 %v75
  %135 = vmatprep.subr.bf16.mxu0 %v51
  %136 = vmatpush1.bf16.msra.mxu0 %v50
  %137 = vmatprep.subr.bf16.mxu0 0
  %138 = vmatpush2.bf16.msra.mxu0 0
  %139 = vmatprep.subr.bf16.mxu0 0
  %140 = vmatpush2.bf16.msra.mxu0 0
  %141 = vmatprep.subr.bf16.mxu0 0
  %142 = vmatpush2.bf16.msra.mxu0 0
  %143 = vmatprep.subr.bf16.mxu0 0
  %144 = vmatpush2.bf16.msra.mxu0 0
  %145 = vmatprep.subr.bf16.mxu0 0
  %146 = vmatpush2.bf16.msra.mxu0 0
  %147 = vmatprep.subr.bf16.mxu0 0
  %148 = vmatpush2.bf16.msra.mxu0 0
  %149 = vmatprep.subr.bf16.mxu0 0
  %150 = vmatpush2.bf16.msra.mxu0 0
  %151 = vmatprep.subr.bf16.mxu0 0
  %152 = vmatpush2.bf16.msra.mxu0 0
  %153 = vmatprep.mubr.bf16.mxu0 0
  %154 = vmatmul.mubr.bf16.gmra.mxu0 %v62
  %v155 = vpop.f32.mrf.mxu0
  %v156 = vadd.f32 0.0, %v155
  %v157 = vpop.f32.mrf.mxu0
  %v158 = vadd.f32 0.0, %v157
  %v159 = vpop.f32.mrf.mxu0
  %v160 = vpop.f32.mrf.mxu0
  %161 = vdwg.mxu0
  %162 = vst [vmem:[%s3] sm:$0x3f] %v115
  %163 = vst [vmem:[%s3 + $0x8] sm:$0x3f] %v117
  %164 = vst [vmem:[%s3 + $0x10] sm:$0x3f] %v156
  %vm165 = vcmask 62464
  %166 = vst.msk [vmem:[%s3 + $0x18] sm:$0x3f] %vm165, %v158
  %v167 = vld [vmem:[%s3] sm:$0x3f]
  %v168 = vld [vmem:[%s3 + $0x8] sm:$0x3f]
  %v169 = vld [vmem:[%s3 + $0x10] sm:$0x3f]
  %v170 = vld [vmem:[%s3 + $0x18] sm:$0x3f]
  %s171 = scalar_lea.vmem %s0, 64
  %v172 = vld [vmem:[%s171] sm:$0xff]
  %v173 = vld [vmem:[%s171 + $0x8] sm:$0xff]
  %v174 = vld [vmem:[%s171 + $0x10] sm:$0xff]
  %v175 = vld [vmem:[%s171 + $0x18] sm:$0xff]
  %v176 = vld [vmem:[%s171 + $0x20] sm:$0xff]
  %v177 = vld [vmem:[%s171 + $0x28] sm:$0xff]
  %v178 = vld [vmem:[%s171 + $0x30] sm:$0x11]
  %v179 = vld [vmem:[%s171 + $0x38] sm:$0x11]
  %v188 = vunpack.c.l.b16 %v172
  %v189 = vunpack.c.h.b16 %v172
  %v190 = vunpack.c.l.b16 %v173
  %v191 = vunpack.c.h.b16 %v173
  %v192 = vunpack.c.l.b16 %v174
  %v193 = vunpack.c.h.b16 %v174
  %v194 = vunpack.c.l.b16 %v175
  %v195 = vunpack.c.h.b16 %v175
  %v196 = vunpack.c.l.b16 %v176
  %v197 = vunpack.c.h.b16 %v176
  %v198 = vunpack.c.l.b16 %v177
  %v199 = vunpack.c.h.b16 %v177
  %v200 = vunpack.c.l.b16 %v178
  %v201 = vunpack.c.h.b16 %v178
  %v202 = vunpack.c.l.b16 %v179
  %v203 = vunpack.c.h.b16 %v179
  %v204 = vpack.c.b16 %v192, %v188
  %v205 = vpack.c.b16 %v193, %v189
  %v206 = vpack.c.b16 %v194, %v190
  %v207 = vpack.c.b16 %v195, %v191
  %v208 = vpack.c.b16 %v200, %v196
  %v209 = vpack.c.b16 %v201, %v197
  %v210 = vpack.c.b16 %v202, %v198
  %v211 = vpack.c.b16 %v203, %v199
  %v217 = vand.u32 %v208, %v67
  %v220 = vand.u32 %v209, %v67
  %v223 = vand.u32 %v210, %v67
  %v226 = vand.u32 %v211, %v67
  %228 = vmatprep.subr.bf16.mxu0 0
  %229 = vmatpush1.bf16.msra.mxu0 0
  %230 = vmatprep.subr.bf16.mxu0 0
  %231 = vmatpush1.bf16.msra.mxu0 0
  %232 = vmatprep.subr.bf16.mxu0 0
  %233 = vmatpush1.bf16.msra.mxu0 0
  %234 = vmatprep.subr.bf16.mxu0 0
  %235 = vmatpush1.bf16.msra.mxu0 0
  %236 = vmatprep.subr.bf16.mxu0 0
  %237 = vmatpush1.bf16.msra.mxu0 0
  %238 = vmatprep.subr.bf16.mxu0 0
  %239 = vmatpush1.bf16.msra.mxu0 0
  %240 = vmatprep.subr.bf16.mxu0 %v220
  %241 = vmatpush1.bf16.msra.mxu0 %v217
  %242 = vmatprep.subr.bf16.mxu0 %v205
  %243 = vmatpush1.bf16.msra.mxu0 %v204
  %244 = vmatprep.subr.bf16.mxu0 0
  %245 = vmatpush2.bf16.msra.mxu0 0
  %246 = vmatprep.subr.bf16.mxu0 0
  %247 = vmatpush2.bf16.msra.mxu0 0
  %248 = vmatprep.subr.bf16.mxu0 0
  %249 = vmatpush2.bf16.msra.mxu0 0
  %250 = vmatprep.subr.bf16.mxu0 0
  %251 = vmatpush2.bf16.msra.mxu0 0
  %252 = vmatprep.subr.bf16.mxu0 0
  %253 = vmatpush2.bf16.msra.mxu0 0
  %254 = vmatprep.subr.bf16.mxu0 0
  %255 = vmatpush2.bf16.msra.mxu0 0
  %256 = vmatprep.subr.bf16.mxu0 0
  %257 = vmatpush2.bf16.msra.mxu0 0
  %258 = vmatprep.subr.bf16.mxu0 0
  %259 = vmatpush2.bf16.msra.mxu0 0
  %260 = vmatprep.mubr.bf16.mxu0 0
  %261 = vmatmul.mubr.bf16.gmra.mxu0 %v62
  %v262 = vpop.f32.mrf.mxu0
  %v263 = vadd.f32 0.0, %v262
  %v264 = vpop.f32.mrf.mxu0
  %v265 = vadd.f32 0.0, %v264
  %v266 = vpop.f32.mrf.mxu0
  %v267 = vpop.f32.mrf.mxu0
  %268 = vdwg.mxu0
  %269 = vmatprep.subr.bf16.mxu0 0
  %270 = vmatpush1.bf16.msra.mxu0 0
  %271 = vmatprep.subr.bf16.mxu0 0
  %272 = vmatpush1.bf16.msra.mxu0 0
  %273 = vmatprep.subr.bf16.mxu0 0
  %274 = vmatpush1.bf16.msra.mxu0 0
  %275 = vmatprep.subr.bf16.mxu0 0
  %276 = vmatpush1.bf16.msra.mxu0 0
  %277 = vmatprep.subr.bf16.mxu0 0
  %278 = vmatpush1.bf16.msra.mxu0 0
  %279 = vmatprep.subr.bf16.mxu0 0
  %280 = vmatpush1.bf16.msra.mxu0 0
  %281 = vmatprep.subr.bf16.mxu0 %v226
  %282 = vmatpush1.bf16.msra.mxu0 %v223
  %283 = vmatprep.subr.bf16.mxu0 %v207
  %284 = vmatpush1.bf16.msra.mxu0 %v206
  %285 = vmatprep.subr.bf16.mxu0 0
  %286 = vmatpush2.bf16.msra.mxu0 0
  %287 = vmatprep.subr.bf16.mxu0 0
  %288 = vmatpush2.bf16.msra.mxu0 0
  %289 = vmatprep.subr.bf16.mxu0 0
  %290 = vmatpush2.bf16.msra.mxu0 0
  %291 = vmatprep.subr.bf16.mxu0 0
  %292 = vmatpush2.bf16.msra.mxu0 0
  %293 = vmatprep.subr.bf16.mxu0 0
  %294 = vmatpush2.bf16.msra.mxu0 0
  %295 = vmatprep.subr.bf16.mxu0 0
  %296 = vmatpush2.bf16.msra.mxu0 0
  %297 = vmatprep.subr.bf16.mxu0 0
  %298 = vmatpush2.bf16.msra.mxu0 0
  %299 = vmatprep.subr.bf16.mxu0 0
  %300 = vmatpush2.bf16.msra.mxu0 0
  %301 = vmatprep.mubr.bf16.mxu0 0
  %302 = vmatmul.mubr.bf16.gmra.mxu0 %v62
  %v303 = vpop.f32.mrf.mxu0
  %v304 = vadd.f32 0.0, %v303
  %v305 = vpop.f32.mrf.mxu0
  %v306 = vadd.f32 0.0, %v305
  %v307 = vpop.f32.mrf.mxu0
  %v308 = vpop.f32.mrf.mxu0
  %309 = vdwg.mxu0
  %v310 = vmax.f32 %v167, %v263
  %v311 = vmax.f32 %v168, %v265
  %v312 = vmax.f32 %v169, %v304
  %v313 = vmax.f32 %v170, %v306
  %314 = vst [vmem:[%s3] sm:$0x3f] %v310
  %315 = vst [vmem:[%s3 + $0x8] sm:$0x3f] %v311
  %316 = vst [vmem:[%s3 + $0x10] sm:$0x3f] %v312
  %317 = vst.msk [vmem:[%s3 + $0x18] sm:$0x3f] %vm165, %v313
  %v318 = vld [vmem:[%s3] sm:$0x3f]
  %v319 = vld [vmem:[%s3 + $0x8] sm:$0x3f]
  %v320 = vld [vmem:[%s3 + $0x10] sm:$0x3f]
  %v321 = vld [vmem:[%s3 + $0x18] sm:$0x3f]
  %s322 = scalar_lea.vmem %s0, 128
  %v323 = vld [vmem:[%s322] sm:$0xff]
  %v324 = vld [vmem:[%s322 + $0x8] sm:$0xff]
  %v325 = vld [vmem:[%s322 + $0x10] sm:$0xff]
  %v326 = vld [vmem:[%s322 + $0x18] sm:$0xff]
  %v327 = vld [vmem:[%s322 + $0x20] sm:$0xff]
  %v328 = vld [vmem:[%s322 + $0x28] sm:$0xff]
  %v329 = vld [vmem:[%s322 + $0x30] sm:$0x11]
  %v330 = vld [vmem:[%s322 + $0x38] sm:$0x11]
  %v339 = vunpack.c.l.b16 %v323
  %v340 = vunpack.c.h.b16 %v323
  %v341 = vunpack.c.l.b16 %v324
  %v342 = vunpack.c.h.b16 %v324
  %v343 = vunpack.c.l.b16 %v325
  %v344 = vunpack.c.h.b16 %v325
  %v345 = vunpack.c.l.b16 %v326
  %v346 = vunpack.c.h.b16 %v326
  %v347 = vunpack.c.l.b16 %v327
  %v348 = vunpack.c.h.b16 %v327
  %v349 = vunpack.c.l.b16 %v328
  %v350 = vunpack.c.h.b16 %v328
  %v351 = vunpack.c.l.b16 %v329
  %v352 = vunpack.c.h.b16 %v329
  %v353 = vunpack.c.l.b16 %v330
  %v354 = vunpack.c.h.b16 %v330
  %v355 = vpack.c.b16 %v343, %v339
  %v356 = vpack.c.b16 %v344, %v340
  %v357 = vpack.c.b16 %v345, %v341
  %v358 = vpack.c.b16 %v346, %v342
  %v359 = vpack.c.b16 %v351, %v347
  %v360 = vpack.c.b16 %v352, %v348
  %v361 = vpack.c.b16 %v353, %v349
  %v362 = vpack.c.b16 %v354, %v350
  %v368 = vand.u32 %v359, %v67
  %v371 = vand.u32 %v360, %v67
  %v374 = vand.u32 %v361, %v67
  %v377 = vand.u32 %v362, %v67
  %379 = vmatprep.subr.bf16.mxu0 0
  %380 = vmatpush1.bf16.msra.mxu0 0
  %381 = vmatprep.subr.bf16.mxu0 0
  %382 = vmatpush1.bf16.msra.mxu0 0
  %383 = vmatprep.subr.bf16.mxu0 0
  %384 = vmatpush1.bf16.msra.mxu0 0
  %385 = vmatprep.subr.bf16.mxu0 0
  %386 = vmatpush1.bf16.msra.mxu0 0
  %387 = vmatprep.subr.bf16.mxu0 0
  %388 = vmatpush1.bf16.msra.mxu0 0
  %389 = vmatprep.subr.bf16.mxu0 0
  %390 = vmatpush1.bf16.msra.mxu0 0
  %391 = vmatprep.subr.bf16.mxu0 %v371
  %392 = vmatpush1.bf16.msra.mxu0 %v368
  %393 = vmatprep.subr.bf16.mxu0 %v356
  %394 = vmatpush1.bf16.msra.mxu0 %v355
  %395 = vmatprep.subr.bf16.mxu0 0
  %396 = vmatpush2.bf16.msra.mxu0 0
  %397 = vmatprep.subr.bf16.mxu0 0
  %398 = vmatpush2.bf16.msra.mxu0 0
  %399 = vmatprep.subr.bf16.mxu0 0
  %400 = vmatpush2.bf16.msra.mxu0 0
  %401 = vmatprep.subr.bf16.mxu0 0
  %402 = vmatpush2.bf16.msra.mxu0 0
  %403 = vmatprep.subr.bf16.mxu0 0
  %404 = vmatpush2.bf16.msra.mxu0 0
  %405 = vmatprep.subr.bf16.mxu0 0
  %406 = vmatpush2.bf16.msra.mxu0 0
  %407 = vmatprep.subr.bf16.mxu0 0
  %408 = vmatpush2.bf16.msra.mxu0 0
  %409 = vmatprep.subr.bf16.mxu0 0
  %410 = vmatpush2.bf16.msra.mxu0 0
  %411 = vmatprep.mubr.bf16.mxu0 0
  %412 = vmatmul.mubr.bf16.gmra.mxu0 %v62
  %v413 = vpop.f32.mrf.mxu0
  %v414 = vadd.f32 0.0, %v413
  %v415 = vpop.f32.mrf.mxu0
  %v416 = vadd.f32 0.0, %v415
  %v417 = vpop.f32.mrf.mxu0
  %v418 = vpop.f32.mrf.mxu0
  %419 = vdwg.mxu0
  %420 = vmatprep.subr.bf16.mxu0 0
  %421 = vmatpush1.bf16.msra.mxu0 0
  %422 = vmatprep.subr.bf16.mxu0 0
  %423 = vmatpush1.bf16.msra.mxu0 0
  %424 = vmatprep.subr.bf16.mxu0 0
  %425 = vmatpush1.bf16.msra.mxu0 0
  %426 = vmatprep.subr.bf16.mxu0 0
  %427 = vmatpush1.bf16.msra.mxu0 0
  %428 = vmatprep.subr.bf16.mxu0 0
  %429 = vmatpush1.bf16.msra.mxu0 0
  %430 = vmatprep.subr.bf16.mxu0 0
  %431 = vmatpush1.bf16.msra.mxu0 0
  %432 = vmatprep.subr.bf16.mxu0 %v377
  %433 = vmatpush1.bf16.msra.mxu0 %v374
  %434 = vmatprep.subr.bf16.mxu0 %v358
  %435 = vmatpush1.bf16.msra.mxu0 %v357
  %436 = vmatprep.subr.bf16.mxu0 0
  %437 = vmatpush2.bf16.msra.mxu0 0
  %438 = vmatprep.subr.bf16.mxu0 0
  %439 = vmatpush2.bf16.msra.mxu0 0
  %440 = vmatprep.subr.bf16.mxu0 0
  %441 = vmatpush2.bf16.msra.mxu0 0
  %442 = vmatprep.subr.bf16.mxu0 0
  %443 = vmatpush2.bf16.msra.mxu0 0
  %444 = vmatprep.subr.bf16.mxu0 0
  %445 = vmatpush2.bf16.msra.mxu0 0
  %446 = vmatprep.subr.bf16.mxu0 0
  %447 = vmatpush2.bf16.msra.mxu0 0
  %448 = vmatprep.subr.bf16.mxu0 0
  %449 = vmatpush2.bf16.msra.mxu0 0
  %450 = vmatprep.subr.bf16.mxu0 0
  %451 = vmatpush2.bf16.msra.mxu0 0
  %452 = vmatprep.mubr.bf16.mxu0 0
  %453 = vmatmul.mubr.bf16.gmra.mxu0 %v62
  %v454 = vpop.f32.mrf.mxu0
  %v455 = vadd.f32 0.0, %v454
  %v456 = vpop.f32.mrf.mxu0
  %v457 = vadd.f32 0.0, %v456
  %v458 = vpop.f32.mrf.mxu0
  %v459 = vpop.f32.mrf.mxu0
  %460 = vdwg.mxu0
  %v461 = vmax.f32 %v318, %v414
  %v462 = vmax.f32 %v319, %v416
  %v463 = vmax.f32 %v320, %v455
  %v464 = vmax.f32 %v321, %v457
  %465 = vst [vmem:[%s3] sm:$0x3f] %v461
  %466 = vst [vmem:[%s3 + $0x8] sm:$0x3f] %v462
  %467 = vst [vmem:[%s3 + $0x10] sm:$0x3f] %v463
  %468 = vst.msk [vmem:[%s3 + $0x18] sm:$0x3f] %vm165, %v464
  %v469 = vld [vmem:[%s3] sm:$0x3f]
  %v470 = vld [vmem:[%s3 + $0x8] sm:$0x3f]
  %v471 = vld [vmem:[%s3 + $0x10] sm:$0x3f]
  %v472 = vld [vmem:[%s3 + $0x18] sm:$0x3f]
  %s473 = scalar_lea.vmem %s0, 192
  %v474 = vld [vmem:[%s473] sm:$0xff]
  %v475 = vld [vmem:[%s473 + $0x8] sm:$0xff]
  %v476 = vld [vmem:[%s473 + $0x10] sm:$0xff]
  %v477 = vld [vmem:[%s473 + $0x18] sm:$0xff]
  %v478 = vld [vmem:[%s473 + $0x20] sm:$0xff]
  %v479 = vld [vmem:[%s473 + $0x28] sm:$0xff]
  %v480 = vld [vmem:[%s473 + $0x30] sm:$0x11]
  %v481 = vld [vmem:[%s473 + $0x38] sm:$0x11]
  %v490 = vunpack.c.l.b16 %v474
  %v491 = vunpack.c.h.b16 %v474
  %v492 = vunpack.c.l.b16 %v475
  %v493 = vunpack.c.h.b16 %v475
  %v494 = vunpack.c.l.b16 %v476
  %v495 = vunpack.c.h.b16 %v476
  %v496 = vunpack.c.l.b16 %v477
  %v497 = vunpack.c.h.b16 %v477
  %v498 = vunpack.c.l.b16 %v478
  %v499 = vunpack.c.h.b16 %v478
  %v500 = vunpack.c.l.b16 %v479
  %v501 = vunpack.c.h.b16 %v479
  %v502 = vunpack.c.l.b16 %v480
  %v503 = vunpack.c.h.b16 %v480
  %v504 = vunpack.c.l.b16 %v481
  %v505 = vunpack.c.h.b16 %v481
  %v506 = vpack.c.b16 %v494, %v490
  %v507 = vpack.c.b16 %v495, %v491
  %v508 = vpack.c.b16 %v496, %v492
  %v509 = vpack.c.b16 %v497, %v493
  %v510 = vpack.c.b16 %v502, %v498
  %v511 = vpack.c.b16 %v503, %v499
  %v512 = vpack.c.b16 %v504, %v500
  %v513 = vpack.c.b16 %v505, %v501
  %v519 = vand.u32 %v510, %v67
  %v522 = vand.u32 %v511, %v67
  %v525 = vand.u32 %v512, %v67
  %v528 = vand.u32 %v513, %v67
  %530 = vmatprep.subr.bf16.mxu0 0
  %531 = vmatpush1.bf16.msra.mxu0 0
  %532 = vmatprep.subr.bf16.mxu0 0
  %533 = vmatpush1.bf16.msra.mxu0 0
  %534 = vmatprep.subr.bf16.mxu0 0
  %535 = vmatpush1.bf16.msra.mxu0 0
  %536 = vmatprep.subr.bf16.mxu0 0
  %537 = vmatpush1.bf16.msra.mxu0 0
  %538 = vmatprep.subr.bf16.mxu0 0
  %539 = vmatpush1.bf16.msra.mxu0 0
  %540 = vmatprep.subr.bf16.mxu0 0
  %541 = vmatpush1.bf16.msra.mxu0 0
  %542 = vmatprep.subr.bf16.mxu0 %v522
  %543 = vmatpush1.bf16.msra.mxu0 %v519
  %544 = vmatprep.subr.bf16.mxu0 %v507
  %545 = vmatpush1.bf16.msra.mxu0 %v506
  %546 = vmatprep.subr.bf16.mxu0 0
  %547 = vmatpush2.bf16.msra.mxu0 0
  %548 = vmatprep.subr.bf16.mxu0 0
  %549 = vmatpush2.bf16.msra.mxu0 0
  %550 = vmatprep.subr.bf16.mxu0 0
  %551 = vmatpush2.bf16.msra.mxu0 0
  %552 = vmatprep.subr.bf16.mxu0 0
  %553 = vmatpush2.bf16.msra.mxu0 0
  %554 = vmatprep.subr.bf16.mxu0 0
  %555 = vmatpush2.bf16.msra.mxu0 0
  %556 = vmatprep.subr.bf16.mxu0 0
  %557 = vmatpush2.bf16.msra.mxu0 0
  %558 = vmatprep.subr.bf16.mxu0 0
  %559 = vmatpush2.bf16.msra.mxu0 0
  %560 = vmatprep.subr.bf16.mxu0 0
  %561 = vmatpush2.bf16.msra.mxu0 0
  %562 = vmatprep.mubr.bf16.mxu0 0
  %563 = vmatmul.mubr.bf16.gmra.mxu0 %v62
  %v564 = vpop.f32.mrf.mxu0
  %v565 = vadd.f32 0.0, %v564
  %v566 = vpop.f32.mrf.mxu0
  %v567 = vadd.f32 0.0, %v566
  %v568 = vpop.f32.mrf.mxu0
  %v569 = vpop.f32.mrf.mxu0
  %570 = vdwg.mxu0
  %571 = vmatprep.subr.bf16.mxu0 0
  %572 = vmatpush1.bf16.msra.mxu0 0
  %573 = vmatprep.subr.bf16.mxu0 0
  %574 = vmatpush1.bf16.msra.mxu0 0
  %575 = vmatprep.subr.bf16.mxu0 0
  %576 = vmatpush1.bf16.msra.mxu0 0
  %577 = vmatprep.subr.bf16.mxu0 0
  %578 = vmatpush1.bf16.msra.mxu0 0
  %579 = vmatprep.subr.bf16.mxu0 0
  %580 = vmatpush1.bf16.msra.mxu0 0
  %581 = vmatprep.subr.bf16.mxu0 0
  %582 = vmatpush1.bf16.msra.mxu0 0
  %583 = vmatprep.subr.bf16.mxu0 %v528
  %584 = vmatpush1.bf16.msra.mxu0 %v525
  %585 = vmatprep.subr.bf16.mxu0 %v509
  %586 = vmatpush1.bf16.msra.mxu0 %v508
  %587 = vmatprep.subr.bf16.mxu0 0
  %588 = vmatpush2.bf16.msra.mxu0 0
  %589 = vmatprep.subr.bf16.mxu0 0
  %590 = vmatpush2.bf16.msra.mxu0 0
  %591 = vmatprep.subr.bf16.mxu0 0
  %592 = vmatpush2.bf16.msra.mxu0 0
  %593 = vmatprep.subr.bf16.mxu0 0
  %594 = vmatpush2.bf16.msra.mxu0 0
  %595 = vmatprep.subr.bf16.mxu0 0
  %596 = vmatpush2.bf16.msra.mxu0 0
  %597 = vmatprep.subr.bf16.mxu0 0
  %598 = vmatpush2.bf16.msra.mxu0 0
  %599 = vmatprep.subr.bf16.mxu0 0
  %600 = vmatpush2.bf16.msra.mxu0 0
  %601 = vmatprep.subr.bf16.mxu0 0
  %602 = vmatpush2.bf16.msra.mxu0 0
  %603 = vmatprep.mubr.bf16.mxu0 0
  %604 = vmatmul.mubr.bf16.gmra.mxu0 %v62
  %v605 = vpop.f32.mrf.mxu0
  %v606 = vadd.f32 0.0, %v605
  %v607 = vpop.f32.mrf.mxu0
  %v608 = vadd.f32 0.0, %v607
  %v609 = vpop.f32.mrf.mxu0
  %v610 = vpop.f32.mrf.mxu0
  %611 = vdwg.mxu0
  %v612 = vmax.f32 %v469, %v565
  %v613 = vmax.f32 %v470, %v567
  %v614 = vmax.f32 %v471, %v606
  %v615 = vmax.f32 %v472, %v608
  %616 = vst [vmem:[%s3] sm:$0x3f] %v612
  %617 = vst [vmem:[%s3 + $0x8] sm:$0x3f] %v613
  %618 = vst [vmem:[%s3 + $0x10] sm:$0x3f] %v614
  %619 = vst.msk [vmem:[%s3 + $0x18] sm:$0x3f] %vm165, %v615
  %v620 = vld [vmem:[%s3] sm:$0x3f]
  %v621 = vld [vmem:[%s3 + $0x8] sm:$0x3f]
  %v622 = vld [vmem:[%s3 + $0x10] sm:$0x3f]
  %v623 = vld [vmem:[%s3 + $0x18] sm:$0x3f]
  %v624 = vld [vmem:[%s2] sm:$0x3f]
  %626 = vset.pattern.permute.xlu0 0
  %627 = vperm.xlu0 %626, %v624
  %v628 = vpop.permute.xlu0 %627
  %v630 = vadd.f32 %v620, %v628
  %v631 = vadd.f32 %v621, %v628
  %v632 = vadd.f32 %v622, %v628
  %v633 = vadd.f32 %v623, %v628
  %v634 = vmax.f32 %v630, 0.0
  %v635 = vmax.f32 %v631, 0.0
  %v636 = vmax.f32 %v632, 0.0
  %v637 = vmax.f32 %v633, 0.0
  %638 = vst [vmem:[%s3] sm:$0x3f] %v634
  %639 = vst [vmem:[%s3 + $0x8] sm:$0x3f] %v635
  %640 = vst [vmem:[%s3 + $0x10] sm:$0x3f] %v636
  %641 = vst.msk [vmem:[%s3 + $0x18] sm:$0x3f] %vm165, %v637
  // Predicated region
  $region14: #{lenet_forward.3} parent=0 // pred_check
    _
  $region15: #{lenet_forward.3} parent=0 // pred_check_branch
    %643 = sbr.rel (0) target = $region17
  $region16: #{lenet_forward.3} parent=0 // pred_region
    _
  $region17: #{lenet_forward.3} parent=0 // pred_fallthru
    _
  // Predicated region
  $region18: #{lenet_forward.3} parent=0 // pred_check
    _
  $region19: #{lenet_forward.3} parent=0 // pred_check_branch
    %645 = sbr.rel (0) target = $region21
  $region20: #{lenet_forward.3} parent=0 // pred_region
    _
  $region21: #{lenet_forward.3} parent=0 // pred_fallthru
    _

// kernel: lenet_forward.4
$region0: #{lenet_forward.4}
  #allocation0 [shape = 'u32[]', space=smem, size = 0x4, offset = 0x4, fixed_abs, tag = 'smem constant byte address 0x4 - core index']
  #allocation1 [shape = 'u32[144,128]{1,0:T(1,128)}', space=vmem, size = 0x12000, scoped, tag = 'internal scratch']
  %s0 = inlined_call_operand.vmem [shape: bf16[1,4,150,50], index: 0, kind: input, shape index: {}]
  %s1 = inlined_call_operand.vmem [shape: bf16[16,150], index: 1, kind: input, shape index: {}]
  %s2 = inlined_call_operand.vmem [shape: f32[16,1], index: 2, kind: input, shape index: {}]
  %s3 = inlined_call_operand.vmem [shape: f32[1,16,50], index: 3, kind: output, shape index: {}]
  %s4 = sld [smem:[#allocation0]]
  $region22: #{lenet_forward.4} parent=0
    _
  %s6 = ssub.s32 1, %s4
  %s7 = scalar_select 0, %s6, %s4
  // Predicated region
  $region2: #{lenet_forward.4} parent=0 // pred_check
    _
  $region3: #{lenet_forward.4} parent=0 // pred_check_branch
    %9 = sbr.rel (0) target = $region5
  $region4: #{lenet_forward.4} parent=0 // pred_region
    _
  $region5: #{lenet_forward.4} parent=0 // pred_fallthru
    _
  // Predicated region
  $region6: #{lenet_forward.4} parent=0 // pred_check
    _
  $region7: #{lenet_forward.4} parent=0 // pred_check_branch
    %11 = sbr.rel (0) target = $region9
  $region8: #{lenet_forward.4} parent=0 // pred_region
    _
  $region9: #{lenet_forward.4} parent=0 // pred_fallthru
    _
  // Predicated region
  $region10: #{lenet_forward.4} parent=0 // pred_check
    _
  $region11: #{lenet_forward.4} parent=0 // pred_check_branch
    %13 = sbr.rel (0) target = $region13
  $region12: #{lenet_forward.4} parent=0 // pred_region
    _
  $region13: #{lenet_forward.4} parent=0 // pred_fallthru
    _
  %v15 = vld [vmem:[%s1] sm:$0xff]
  %v16 = vld [vmem:[%s1 + $0x8] sm:$0xff]
  %v17 = vld [vmem:[%s0] sm:$0xf]
  %v18 = vld [vmem:[%s0 + $0x4] sm:$0xf]
  %v19 = vld [vmem:[%s0 + $0x8] sm:$0xf]
  %v20 = vld [vmem:[%s0 + $0xc] sm:$0xf]
  %v21 = vld [vmem:[%s0 + $0x10] sm:$0xf]
  %v22 = vld [vmem:[%s0 + $0x14] sm:$0xf]
  %v23 = vld [vmem:[%s0 + $0x18] sm:$0xf]
  %v24 = vld [vmem:[%s0 + $0x1c] sm:$0xf]
  %v25 = vld [vmem:[%s0 + $0x20] sm:$0xf]
  %v26 = vld [vmem:[%s0 + $0x24] sm:$0xf]
  %v27 = vld [vmem:[%s0 + $0x28] sm:$0xf]
  %v28 = vld [vmem:[%s0 + $0x2c] sm:$0xf]
  %v29 = vld [vmem:[%s0 + $0x30] sm:$0xf]
  %v30 = vld [vmem:[%s0 + $0x34] sm:$0xf]
  %v31 = vld [vmem:[%s0 + $0x38] sm:$0xf]
  %v32 = vld [vmem:[%s0 + $0x3c] sm:$0xf]
  %v33 = vld [vmem:[%s0 + $0x40] sm:$0xf]
  %v34 = vld [vmem:[%s0 + $0x44] sm:$0xf]
  %v35 = vld [vmem:[%s0 + $0x48] sm:$0x7]
  %v38 = vunpack.c.l.b16 %v15
  %v39 = vunpack.c.h.b16 %v15
  %v40 = vunpack.c.l.b16 %v16
  %v41 = vunpack.c.h.b16 %v16
  %v42 = vpack.c.b16 %v40, %v38
  %v43 = vpack.c.b16 %v41, %v39
  %v64 = vunpack.c.l.b16 %v17
  %v65 = vunpack.c.l.b16 %v18
  %v66 = vunpack.c.l.b16 %v19
  %v67 = vunpack.c.l.b16 %v20
  %v68 = vunpack.c.l.b16 %v21
  %v69 = vunpack.c.l.b16 %v22
  %v70 = vunpack.c.l.b16 %v23
  %v71 = vunpack.c.l.b16 %v24
  %v72 = vunpack.c.l.b16 %v25
  %v73 = vunpack.c.l.b16 %v26
  %v74 = vunpack.c.l.b16 %v27
  %v75 = vunpack.c.l.b16 %v28
  %v76 = vunpack.c.l.b16 %v29
  %v77 = vunpack.c.l.b16 %v30
  %v78 = vunpack.c.l.b16 %v31
  %v79 = vunpack.c.l.b16 %v32
  %v80 = vunpack.c.l.b16 %v33
  %v81 = vunpack.c.l.b16 %v34
  %v82 = vunpack.c.l.b16 %v35
  %v83 = vpack.c.b16 %v65, %v64
  %v84 = vpack.c.b16 %v67, %v66
  %v85 = vpack.c.b16 %v69, %v68
  %v86 = vpack.c.b16 %v71, %v70
  %v87 = vpack.c.b16 %v73, %v72
  %v88 = vpack.c.b16 %v75, %v74
  %v89 = vpack.c.b16 %v77, %v76
  %v90 = vpack.c.b16 %v79, %v78
  %v91 = vpack.c.b16 %v81, %v80
  %v92 = vpack.c.b16 %v82, %v82
  %vm102 = vcmask 179200
  %v104 = vsel %vm102, %v43, 0
  %vm106 = vcmask 1042432
  %v108 = vsel %vm106, %v92, 0
  %110 = vmatprep.subr.bf16.mxu0 0
  %111 = vmatpush1.bf16.msra.mxu0 %v90
  %112 = vmatprep.subr.bf16.mxu0 0
  %113 = vmatpush1.bf16.msra.mxu0 %v89
  %114 = vmatprep.subr.bf16.mxu0 0
  %115 = vmatpush1.bf16.msra.mxu0 %v88
  %116 = vmatprep.subr.bf16.mxu0 0
  %117 = vmatpush1.bf16.msra.mxu0 %v87
  %118 = vmatprep.subr.bf16.mxu0 0
  %119 = vmatpush1.bf16.msra.mxu0 %v86
  %120 = vmatprep.subr.bf16.mxu0 0
  %121 = vmatpush1.bf16.msra.mxu0 %v85
  %122 = vmatprep.subr.bf16.mxu0 0
  %123 = vmatpush1.bf16.msra.mxu0 %v84
  %124 = vmatprep.subr.bf16.mxu0 0
  %125 = vmatpush1.bf16.msra.mxu0 %v83
  %126 = vmatprep.subr.bf16.mxu0 0
  %127 = vmatpush2.bf16.msra.mxu0 0
  %128 = vmatprep.subr.bf16.mxu0 0
  %129 = vmatpush2.bf16.msra.mxu0 0
  %130 = vmatprep.subr.bf16.mxu0 0
  %131 = vmatpush2.bf16.msra.mxu0 0
  %132 = vmatprep.subr.bf16.mxu0 0
  %133 = vmatpush2.bf16.msra.mxu0 0
  %134 = vmatprep.subr.bf16.mxu0 0
  %135 = vmatpush2.bf16.msra.mxu0 0
  %136 = vmatprep.subr.bf16.mxu0 0
  %137 = vmatpush2.bf16.msra.mxu0 0
  %138 = vmatprep.subr.bf16.mxu0 0
  %139 = vmatpush2.bf16.msra.mxu0 %v108
  %140 = vmatprep.subr.bf16.mxu0 0
  %141 = vmatpush2.bf16.msra.mxu0 %v91
  %142 = vmatprep.mubr.bf16.mxu0 %v104
  %143 = vmatmul.mubr.bf16.gmra.mxu0 %v42
  %v144 = vpop.f32.mrf.mxu0
  %v145 = vadd.f32 0.0, %v144
  %v146 = vpop.f32.mrf.mxu0
  %v147 = vpop.f32.mrf.mxu0
  %v148 = vadd.f32 0.0, %v147
  %v149 = vpop.f32.mrf.mxu0
  %150 = vdwg.mxu0
  %vm151 = vcmask 408576
  %152 = vst.msk [vmem:[%s3] sm:$0xff] %vm151, %v145
  %153 = vst.msk [vmem:[%s3 + $0x8] sm:$0xff] %vm151, %v148
  %v154 = vld [vmem:[%s3] sm:$0xff]
  %v155 = vld [vmem:[%s3 + $0x8] sm:$0xff]
  %s156 = scalar_lea.vmem %s0, 76
  %v157 = vld [vmem:[%s156] sm:$0xf]
  %v158 = vld [vmem:[%s156 + $0x4] sm:$0xf]
  %v159 = vld [vmem:[%s156 + $0x8] sm:$0xf]
  %v160 = vld [vmem:[%s156 + $0xc] sm:$0xf]
  %v161 = vld [vmem:[%s156 + $0x10] sm:$0xf]
  %v162 = vld [vmem:[%s156 + $0x14] sm:$0xf]
  %v163 = vld [vmem:[%s156 + $0x18] sm:$0xf]
  %v164 = vld [vmem:[%s156 + $0x1c] sm:$0xf]
  %v165 = vld [vmem:[%s156 + $0x20] sm:$0xf]
  %v166 = vld [vmem:[%s156 + $0x24] sm:$0xf]
  %v167 = vld [vmem:[%s156 + $0x28] sm:$0xf]
  %v168 = vld [vmem:[%s156 + $0x2c] sm:$0xf]
  %v169 = vld [vmem:[%s156 + $0x30] sm:$0xf]
  %v170 = vld [vmem:[%s156 + $0x34] sm:$0xf]
  %v171 = vld [vmem:[%s156 + $0x38] sm:$0xf]
  %v172 = vld [vmem:[%s156 + $0x3c] sm:$0xf]
  %v173 = vld [vmem:[%s156 + $0x40] sm:$0xf]
  %v174 = vld [vmem:[%s156 + $0x44] sm:$0xf]
  %v175 = vld [vmem:[%s156 + $0x48] sm:$0x7]
  %v195 = vunpack.c.l.b16 %v157
  %v196 = vunpack.c.l.b16 %v158
  %v197 = vunpack.c.l.b16 %v159
  %v198 = vunpack.c.l.b16 %v160
  %v199 = vunpack.c.l.b16 %v161
  %v200 = vunpack.c.l.b16 %v162
  %v201 = vunpack.c.l.b16 %v163
  %v202 = vunpack.c.l.b16 %v164
  %v203 = vunpack.c.l.b16 %v165
  %v204 = vunpack.c.l.b16 %v166
  %v205 = vunpack.c.l.b16 %v167
  %v206 = vunpack.c.l.b16 %v168
  %v207 = vunpack.c.l.b16 %v169
  %v208 = vunpack.c.l.b16 %v170
  %v209 = vunpack.c.l.b16 %v171
  %v210 = vunpack.c.l.b16 %v172
  %v211 = vunpack.c.l.b16 %v173
  %v212 = vunpack.c.l.b16 %v174
  %v213 = vunpack.c.l.b16 %v175
  %v214 = vpack.c.b16 %v196, %v195
  %v215 = vpack.c.b16 %v198, %v197
  %v216 = vpack.c.b16 %v200, %v199
  %v217 = vpack.c.b16 %v202, %v201
  %v218 = vpack.c.b16 %v204, %v203
  %v219 = vpack.c.b16 %v206, %v205
  %v220 = vpack.c.b16 %v208, %v207
  %v221 = vpack.c.b16 %v210, %v209
  %v222 = vpack.c.b16 %v212, %v211
  %v223 = vpack.c.b16 %v213, %v213
  %v234 = vsel %vm106, %v223, 0
  %236 = vmatprep.subr.bf16.mxu0 0
  %237 = vmatpush1.bf16.msra.mxu0 %v221
  %238 = vmatprep.subr.bf16.mxu0 0
  %239 = vmatpush1.bf16.msra.mxu0 %v220
  %240 = vmatprep.subr.bf16.mxu0 0
  %241 = vmatpush1.bf16.msra.mxu0 %v219
  %242 = vmatprep.subr.bf16.mxu0 0
  %243 = vmatpush1.bf16.msra.mxu0 %v218
  %244 = vmatprep.subr.bf16.mxu0 0
  %245 = vmatpush1.bf16.msra.mxu0 %v217
  %246 = vmatprep.subr.bf16.mxu0 0
  %247 = vmatpush1.bf16.msra.mxu0 %v216
  %248 = vmatprep.subr.bf16.mxu0 0
  %249 = vmatpush1.bf16.msra.mxu0 %v215
  %250 = vmatprep.subr.bf16.mxu0 0
  %251 = vmatpush1.bf16.msra.mxu0 %v214
  %252 = vmatprep.subr.bf16.mxu0 0
  %253 = vmatpush2.bf16.msra.mxu0 0
  %254 = vmatprep.subr.bf16.mxu0 0
  %255 = vmatpush2.bf16.msra.mxu0 0
  %256 = vmatprep.subr.bf16.mxu0 0
  %257 = vmatpush2.bf16.msra.mxu0 0
  %258 = vmatprep.subr.bf16.mxu0 0
  %259 = vmatpush2.bf16.msra.mxu0 0
  %260 = vmatprep.subr.bf16.mxu0 0
  %261 = vmatpush2.bf16.msra.mxu0 0
  %262 = vmatprep.subr.bf16.mxu0 0
  %263 = vmatpush2.bf16.msra.mxu0 0
  %264 = vmatprep.subr.bf16.mxu0 0
  %265 = vmatpush2.bf16.msra.mxu0 %v234
  %266 = vmatprep.subr.bf16.mxu0 0
  %267 = vmatpush2.bf16.msra.mxu0 %v222
  %268 = vmatprep.mubr.bf16.mxu0 %v104
  %269 = vmatmul.mubr.bf16.gmra.mxu0 %v42
  %v270 = vpop.f32.mrf.mxu0
  %v271 = vadd.f32 0.0, %v270
  %v272 = vpop.f32.mrf.mxu0
  %v273 = vpop.f32.mrf.mxu0
  %v274 = vadd.f32 0.0, %v273
  %v275 = vpop.f32.mrf.mxu0
  %276 = vdwg.mxu0
  %v277 = vmax.f32 %v154, %v271
  %v278 = vmax.f32 %v155, %v274
  %279 = vst.msk [vmem:[%s3] sm:$0xff] %vm151, %v277
  %280 = vst.msk [vmem:[%s3 + $0x8] sm:$0xff] %vm151, %v278
  %v281 = vld [vmem:[%s3] sm:$0xff]
  %v282 = vld [vmem:[%s3 + $0x8] sm:$0xff]
  %s283 = scalar_lea.vmem %s0, 152
  %v284 = vld [vmem:[%s283] sm:$0xf]
  %v285 = vld [vmem:[%s283 + $0x4] sm:$0xf]
  %v286 = vld [vmem:[%s283 + $0x8] sm:$0xf]
  %v287 = vld [vmem:[%s283 + $0xc] sm:$0xf]
  %v288 = vld [vmem:[%s283 + $0x10] sm:$0xf]
  %v289 = vld [vmem:[%s283 + $0x14] sm:$0xf]
  %v290 = vld [vmem:[%s283 + $0x18] sm:$0xf]
  %v291 = vld [vmem:[%s283 + $0x1c] sm:$0xf]
  %v292 = vld [vmem:[%s283 + $0x20] sm:$0xf]
  %v293 = vld [vmem:[%s283 + $0x24] sm:$0xf]
  %v294 = vld [vmem:[%s283 + $0x28] sm:$0xf]
  %v295 = vld [vmem:[%s283 + $0x2c] sm:$0xf]
  %v296 = vld [vmem:[%s283 + $0x30] sm:$0xf]
  %v297 = vld [vmem:[%s283 + $0x34] sm:$0xf]
  %v298 = vld [vmem:[%s283 + $0x38] sm:$0xf]
  %v299 = vld [vmem:[%s283 + $0x3c] sm:$0xf]
  %v300 = vld [vmem:[%s283 + $0x40] sm:$0xf]
  %v301 = vld [vmem:[%s283 + $0x44] sm:$0xf]
  %v302 = vld [vmem:[%s283 + $0x48] sm:$0x7]
  %v322 = vunpack.c.l.b16 %v284
  %v323 = vunpack.c.l.b16 %v285
  %v324 = vunpack.c.l.b16 %v286
  %v325 = vunpack.c.l.b16 %v287
  %v326 = vunpack.c.l.b16 %v288
  %v327 = vunpack.c.l.b16 %v289
  %v328 = vunpack.c.l.b16 %v290
  %v329 = vunpack.c.l.b16 %v291
  %v330 = vunpack.c.l.b16 %v292
  %v331 = vunpack.c.l.b16 %v293
  %v332 = vunpack.c.l.b16 %v294
  %v333 = vunpack.c.l.b16 %v295
  %v334 = vunpack.c.l.b16 %v296
  %v335 = vunpack.c.l.b16 %v297
  %v336 = vunpack.c.l.b16 %v298
  %v337 = vunpack.c.l.b16 %v299
  %v338 = vunpack.c.l.b16 %v300
  %v339 = vunpack.c.l.b16 %v301
  %v340 = vunpack.c.l.b16 %v302
  %v341 = vpack.c.b16 %v323, %v322
  %v342 = vpack.c.b16 %v325, %v324
  %v343 = vpack.c.b16 %v327, %v326
  %v344 = vpack.c.b16 %v329, %v328
  %v345 = vpack.c.b16 %v331, %v330
  %v346 = vpack.c.b16 %v333, %v332
  %v347 = vpack.c.b16 %v335, %v334
  %v348 = vpack.c.b16 %v337, %v336
  %v349 = vpack.c.b16 %v339, %v338
  %v350 = vpack.c.b16 %v340, %v340
  %v361 = vsel %vm106, %v350, 0
  %363 = vmatprep.subr.bf16.mxu0 0
  %364 = vmatpush1.bf16.msra.mxu0 %v348
  %365 = vmatprep.subr.bf16.mxu0 0
  %366 = vmatpush1.bf16.msra.mxu0 %v347
  %367 = vmatprep.subr.bf16.mxu0 0
  %368 = vmatpush1.bf16.msra.mxu0 %v346
  %369 = vmatprep.subr.bf16.mxu0 0
  %370 = vmatpush1.bf16.msra.mxu0 %v345
  %371 = vmatprep.subr.bf16.mxu0 0
  %372 = vmatpush1.bf16.msra.mxu0 %v344
  %373 = vmatprep.subr.bf16.mxu0 0
  %374 = vmatpush1.bf16.msra.mxu0 %v343
  %375 = vmatprep.subr.bf16.mxu0 0
  %376 = vmatpush1.bf16.msra.mxu0 %v342
  %377 = vmatprep.subr.bf16.mxu0 0
  %378 = vmatpush1.bf16.msra.mxu0 %v341
  %379 = vmatprep.subr.bf16.mxu0 0
  %380 = vmatpush2.bf16.msra.mxu0 0
  %381 = vmatprep.subr.bf16.mxu0 0
  %382 = vmatpush2.bf16.msra.mxu0 0
  %383 = vmatprep.subr.bf16.mxu0 0
  %384 = vmatpush2.bf16.msra.mxu0 0
  %385 = vmatprep.subr.bf16.mxu0 0
  %386 = vmatpush2.bf16.msra.mxu0 0
  %387 = vmatprep.subr.bf16.mxu0 0
  %388 = vmatpush2.bf16.msra.mxu0 0
  %389 = vmatprep.subr.bf16.mxu0 0
  %390 = vmatpush2.bf16.msra.mxu0 0
  %391 = vmatprep.subr.bf16.mxu0 0
  %392 = vmatpush2.bf16.msra.mxu0 %v361
  %393 = vmatprep.subr.bf16.mxu0 0
  %394 = vmatpush2.bf16.msra.mxu0 %v349
  %395 = vmatprep.mubr.bf16.mxu0 %v104
  %396 = vmatmul.mubr.bf16.gmra.mxu0 %v42
  %v397 = vpop.f32.mrf.mxu0
  %v398 = vadd.f32 0.0, %v397
  %v399 = vpop.f32.mrf.mxu0
  %v400 = vpop.f32.mrf.mxu0
  %v401 = vadd.f32 0.0, %v400
  %v402 = vpop.f32.mrf.mxu0
  %403 = vdwg.mxu0
  %v404 = vmax.f32 %v281, %v398
  %v405 = vmax.f32 %v282, %v401
  %406 = vst.msk [vmem:[%s3] sm:$0xff] %vm151, %v404
  %407 = vst.msk [vmem:[%s3 + $0x8] sm:$0xff] %vm151, %v405
  %v408 = vld [vmem:[%s3] sm:$0xff]
  %v409 = vld [vmem:[%s3 + $0x8] sm:$0xff]
  %s410 = scalar_lea.vmem %s0, 228
  %v411 = vld [vmem:[%s410] sm:$0xf]
  %v412 = vld [vmem:[%s410 + $0x4] sm:$0xf]
  %v413 = vld [vmem:[%s410 + $0x8] sm:$0xf]
  %v414 = vld [vmem:[%s410 + $0xc] sm:$0xf]
  %v415 = vld [vmem:[%s410 + $0x10] sm:$0xf]
  %v416 = vld [vmem:[%s410 + $0x14] sm:$0xf]
  %v417 = vld [vmem:[%s410 + $0x18] sm:$0xf]
  %v418 = vld [vmem:[%s410 + $0x1c] sm:$0xf]
  %v419 = vld [vmem:[%s410 + $0x20] sm:$0xf]
  %v420 = vld [vmem:[%s410 + $0x24] sm:$0xf]
  %v421 = vld [vmem:[%s410 + $0x28] sm:$0xf]
  %v422 = vld [vmem:[%s410 + $0x2c] sm:$0xf]
  %v423 = vld [vmem:[%s410 + $0x30] sm:$0xf]
  %v424 = vld [vmem:[%s410 + $0x34] sm:$0xf]
  %v425 = vld [vmem:[%s410 + $0x38] sm:$0xf]
  %v426 = vld [vmem:[%s410 + $0x3c] sm:$0xf]
  %v427 = vld [vmem:[%s410 + $0x40] sm:$0xf]
  %v428 = vld [vmem:[%s410 + $0x44] sm:$0xf]
  %v429 = vld [vmem:[%s410 + $0x48] sm:$0x7]
  %v449 = vunpack.c.l.b16 %v411
  %v450 = vunpack.c.l.b16 %v412
  %v451 = vunpack.c.l.b16 %v413
  %v452 = vunpack.c.l.b16 %v414
  %v453 = vunpack.c.l.b16 %v415
  %v454 = vunpack.c.l.b16 %v416
  %v455 = vunpack.c.l.b16 %v417
  %v456 = vunpack.c.l.b16 %v418
  %v457 = vunpack.c.l.b16 %v419
  %v458 = vunpack.c.l.b16 %v420
  %v459 = vunpack.c.l.b16 %v421
  %v460 = vunpack.c.l.b16 %v422
  %v461 = vunpack.c.l.b16 %v423
  %v462 = vunpack.c.l.b16 %v424
  %v463 = vunpack.c.l.b16 %v425
  %v464 = vunpack.c.l.b16 %v426
  %v465 = vunpack.c.l.b16 %v427
  %v466 = vunpack.c.l.b16 %v428
  %v467 = vunpack.c.l.b16 %v429
  %v468 = vpack.c.b16 %v450, %v449
  %v469 = vpack.c.b16 %v452, %v451
  %v470 = vpack.c.b16 %v454, %v453
  %v471 = vpack.c.b16 %v456, %v455
  %v472 = vpack.c.b16 %v458, %v457
  %v473 = vpack.c.b16 %v460, %v459
  %v474 = vpack.c.b16 %v462, %v461
  %v475 = vpack.c.b16 %v464, %v463
  %v476 = vpack.c.b16 %v466, %v465
  %v477 = vpack.c.b16 %v467, %v467
  %v488 = vsel %vm106, %v477, 0
  %490 = vmatprep.subr.bf16.mxu0 0
  %491 = vmatpush1.bf16.msra.mxu0 %v475
  %492 = vmatprep.subr.bf16.mxu0 0
  %493 = vmatpush1.bf16.msra.mxu0 %v474
  %494 = vmatprep.subr.bf16.mxu0 0
  %495 = vmatpush1.bf16.msra.mxu0 %v473
  %496 = vmatprep.subr.bf16.mxu0 0
  %497 = vmatpush1.bf16.msra.mxu0 %v472
  %498 = vmatprep.subr.bf16.mxu0 0
  %499 = vmatpush1.bf16.msra.mxu0 %v471
  %500 = vmatprep.subr.bf16.mxu0 0
  %501 = vmatpush1.bf16.msra.mxu0 %v470
  %502 = vmatprep.subr.bf16.mxu0 0
  %503 = vmatpush1.bf16.msra.mxu0 %v469
  %504 = vmatprep.subr.bf16.mxu0 0
  %505 = vmatpush1.bf16.msra.mxu0 %v468
  %506 = vmatprep.subr.bf16.mxu0 0
  %507 = vmatpush2.bf16.msra.mxu0 0
  %508 = vmatprep.subr.bf16.mxu0 0
  %509 = vmatpush2.bf16.msra.mxu0 0
  %510 = vmatprep.subr.bf16.mxu0 0
  %511 = vmatpush2.bf16.msra.mxu0 0
  %512 = vmatprep.subr.bf16.mxu0 0
  %513 = vmatpush2.bf16.msra.mxu0 0
  %514 = vmatprep.subr.bf16.mxu0 0
  %515 = vmatpush2.bf16.msra.mxu0 0
  %516 = vmatprep.subr.bf16.mxu0 0
  %517 = vmatpush2.bf16.msra.mxu0 0
  %518 = vmatprep.subr.bf16.mxu0 0
  %519 = vmatpush2.bf16.msra.mxu0 %v488
  %520 = vmatprep.subr.bf16.mxu0 0
  %521 = vmatpush2.bf16.msra.mxu0 %v476
  %522 = vmatprep.mubr.bf16.mxu0 %v104
  %523 = vmatmul.mubr.bf16.gmra.mxu0 %v42
  %v524 = vpop.f32.mrf.mxu0
  %v525 = vadd.f32 0.0, %v524
  %v526 = vpop.f32.mrf.mxu0
  %v527 = vpop.f32.mrf.mxu0
  %v528 = vadd.f32 0.0, %v527
  %v529 = vpop.f32.mrf.mxu0
  %530 = vdwg.mxu0
  %v531 = vmax.f32 %v408, %v525
  %v532 = vmax.f32 %v409, %v528
  %533 = vst.msk [vmem:[%s3] sm:$0xff] %vm151, %v531
  %534 = vst.msk [vmem:[%s3 + $0x8] sm:$0xff] %vm151, %v532
  %v535 = vld [vmem:[%s3] sm:$0xff]
  %v536 = vld [vmem:[%s3 + $0x8] sm:$0xff]
  %v537 = vld [vmem:[%s2] sm:$0xff]
  %v538 = vld [vmem:[%s2 + $0x8] sm:$0xff]
  %540 = vset.pattern.permute.xlu0 0
  %541 = vperm.xlu0 %540, %v537
  %v542 = vpop.permute.xlu0 %541
  %545 = vset.pattern.permute.xlu0 0
  %546 = vperm.xlu0 %545, %v538
  %v547 = vpop.permute.xlu0 %546
  %v549 = vadd.f32 %v535, %v542
  %v550 = vadd.f32 %v536, %v547
  %v551 = vmax.f32 %v549, 0.0
  %v552 = vmax.f32 %v550, 0.0
  %553 = vst.msk [vmem:[%s3] sm:$0xff] %vm151, %v551
  %554 = vst.msk [vmem:[%s3 + $0x8] sm:$0xff] %vm151, %v552
  // Predicated region
  $region14: #{lenet_forward.4} parent=0 // pred_check
    _
  $region15: #{lenet_forward.4} parent=0 // pred_check_branch
    %556 = sbr.rel (0) target = $region17
  $region16: #{lenet_forward.4} parent=0 // pred_region
    _
  $region17: #{lenet_forward.4} parent=0 // pred_fallthru
    _
  // Predicated region
  $region18: #{lenet_forward.4} parent=0 // pred_check
    _
  $region19: #{lenet_forward.4} parent=0 // pred_check_branch
    %558 = sbr.rel (0) target = $region21
  $region20: #{lenet_forward.4} parent=0 // pred_region
    _
  $region21: #{lenet_forward.4} parent=0 // pred_fallthru
    _

// kernel: lenet_forward.5
$region0: #{lenet_forward.5}
  #allocation0 [shape = 'u32[]', space=smem, size = 0x4, offset = 0x4, fixed_abs, tag = 'smem constant byte address 0x4 - core index']
  #allocation1 [shape = 'u32[144,128]{1,0:T(1,128)}', space=vmem, size = 0x12000, scoped, tag = 'internal scratch']
  %s0 = inlined_call_operand.vmem [shape: bf16[8,400], index: 0, kind: input, shape index: {}]
  %s1 = inlined_call_operand.vmem [shape: bf16[400,128], index: 1, kind: input, shape index: {}]
  %s2 = inlined_call_operand.vmem [shape: f32[1,128], index: 2, kind: input, shape index: {}]
  %s3 = inlined_call_operand.vmem [shape: bf16[128,128], index: 3, kind: input, shape index: {}]
  %s4 = inlined_call_operand.vmem [shape: f32[1,128], index: 4, kind: input, shape index: {}]
  %s5 = inlined_call_operand.vmem [shape: bf16[128,128], index: 5, kind: input, shape index: {}]
  %s6 = inlined_call_operand.vmem [shape: f32[1,128], index: 6, kind: input, shape index: {}]
  %s7 = inlined_call_operand.vmem [shape: f32[8,128], index: 7, kind: output, shape index: {0}]
  %s8 = inlined_call_operand.vmem [shape: f32[8,128], index: 8, kind: output, shape index: {1}]
  %9 = xla_tuple %s7, %s8
  %s10 = sld [smem:[#allocation0]]
  $region46: #{lenet_forward.5} parent=0
    _
  %s12 = ssub.s32 1, %s10
  %s13 = scalar_select 0, %s12, %s10
  // Predicated region
  $region2: #{lenet_forward.5} parent=0 // pred_check
    _
  $region3: #{lenet_forward.5} parent=0 // pred_check_branch
    %15 = sbr.rel (0) target = $region5
  $region4: #{lenet_forward.5} parent=0 // pred_region
    _
  $region5: #{lenet_forward.5} parent=0 // pred_fallthru
    _
  // Predicated region
  $region6: #{lenet_forward.5} parent=0 // pred_check
    _
  $region7: #{lenet_forward.5} parent=0 // pred_check_branch
    %17 = sbr.rel (0) target = $region9
  $region8: #{lenet_forward.5} parent=0 // pred_region
    _
  $region9: #{lenet_forward.5} parent=0 // pred_fallthru
    _
  // Predicated region
  $region10: #{lenet_forward.5} parent=0 // pred_check
    _
  $region11: #{lenet_forward.5} parent=0 // pred_check_branch
    %19 = sbr.rel (0) target = $region13
  $region12: #{lenet_forward.5} parent=0 // pred_region
    _
  $region13: #{lenet_forward.5} parent=0 // pred_fallthru
    _
  // Predicated region
  $region14: #{lenet_forward.5} parent=0 // pred_check
    _
  $region15: #{lenet_forward.5} parent=0 // pred_check_branch
    %21 = sbr.rel (0) target = $region17
  $region16: #{lenet_forward.5} parent=0 // pred_region
    _
  $region17: #{lenet_forward.5} parent=0 // pred_fallthru
    _
  // Predicated region
  $region18: #{lenet_forward.5} parent=0 // pred_check
    _
  $region19: #{lenet_forward.5} parent=0 // pred_check_branch
    %23 = sbr.rel (0) target = $region21
  $region20: #{lenet_forward.5} parent=0 // pred_region
    _
  $region21: #{lenet_forward.5} parent=0 // pred_fallthru
    _
  // Predicated region
  $region22: #{lenet_forward.5} parent=0 // pred_check
    _
  $region23: #{lenet_forward.5} parent=0 // pred_check_branch
    %25 = sbr.rel (0) target = $region25
  $region24: #{lenet_forward.5} parent=0 // pred_region
    _
  $region25: #{lenet_forward.5} parent=0 // pred_fallthru
    _
  // Predicated region
  $region26: #{lenet_forward.5} parent=0 // pred_check
    _
  $region27: #{lenet_forward.5} parent=0 // pred_check_branch
    %27 = sbr.rel (0) target = $region29
  $region28: #{lenet_forward.5} parent=0 // pred_region
    _
  $region29: #{lenet_forward.5} parent=0 // pred_fallthru
    _
  %v29 = vld [vmem:[%s0] sm:$0xff]
  %v30 = vld [vmem:[%s0 + $0x8] sm:$0xff]
  %v31 = vld [vmem:[%s1] sm:$0xf]
  %v32 = vld [vmem:[%s1 + $0x4] sm:$0xf]
  %v33 = vld [vmem:[%s1 + $0x8] sm:$0xf]
  %v34 = vld [vmem:[%s1 + $0xc] sm:$0xf]
  %v35 = vld [vmem:[%s1 + $0x10] sm:$0xf]
  %v36 = vld [vmem:[%s1 + $0x14] sm:$0xf]
  %v37 = vld [vmem:[%s1 + $0x18] sm:$0xf]
  %v38 = vld [vmem:[%s1 + $0x1c] sm:$0xf]
  %v39 = vld [vmem:[%s1 + $0x20] sm:$0xf]
  %v40 = vld [vmem:[%s1 + $0x24] sm:$0xf]
  %v41 = vld [vmem:[%s1 + $0x28] sm:$0xf]
  %v42 = vld [vmem:[%s1 + $0x2c] sm:$0xf]
  %v43 = vld [vmem:[%s1 + $0x30] sm:$0xf]
  %v44 = vld [vmem:[%s1 + $0x34] sm:$0xf]
  %v45 = vld [vmem:[%s1 + $0x38] sm:$0xf]
  %v46 = vld [vmem:[%s1 + $0x3c] sm:$0xf]
  %v47 = vld [vmem:[%s1 + $0x40] sm:$0xf]
  %v48 = vld [vmem:[%s1 + $0x44] sm:$0xf]
  %v49 = vld [vmem:[%s1 + $0x48] sm:$0xf]
  %v50 = vld [vmem:[%s1 + $0x4c] sm:$0xf]
  %v51 = vld [vmem:[%s1 + $0x50] sm:$0xf]
  %v52 = vld [vmem:[%s1 + $0x54] sm:$0xf]
  %v53 = vld [vmem:[%s1 + $0x58] sm:$0xf]
  %v54 = vld [vmem:[%s1 + $0x5c] sm:$0xf]
  %v55 = vld [vmem:[%s1 + $0x60] sm:$0xf]
  %v56 = vld [vmem:[%s1 + $0x64] sm:$0xf]
  %v57 = vld [vmem:[%s1 + $0x68] sm:$0xf]
  %v58 = vld [vmem:[%s1 + $0x6c] sm:$0xf]
  %v59 = vld [vmem:[%s1 + $0x70] sm:$0xf]
  %v60 = vld [vmem:[%s1 + $0x74] sm:$0xf]
  %v61 = vld [vmem:[%s1 + $0x78] sm:$0xf]
  %v62 = vld [vmem:[%s1 + $0x7c] sm:$0xf]
  %v63 = vld [vmem:[%s1 + $0x80] sm:$0xf]
  %v64 = vld [vmem:[%s1 + $0x84] sm:$0xf]
  %v65 = vld [vmem:[%s1 + $0x88] sm:$0xf]
  %v66 = vld [vmem:[%s1 + $0x8c] sm:$0xf]
  %v67 = vld [vmem:[%s1 + $0x90] sm:$0xf]
  %v68 = vld [vmem:[%s1 + $0x94] sm:$0xf]
  %v69 = vld [vmem:[%s1 + $0x98] sm:$0xf]
  %v70 = vld [vmem:[%s1 + $0x9c] sm:$0xf]
  %v71 = vld [vmem:[%s1 + $0xa0] sm:$0xf]
  %v72 = vld [vmem:[%s1 + $0xa4] sm:$0xf]
  %v73 = vld [vmem:[%s1 + $0xa8] sm:$0xf]
  %v74 = vld [vmem:[%s1 + $0xac] sm:$0xf]
  %v75 = vld [vmem:[%s1 + $0xb0] sm:$0xf]
  %v76 = vld [vmem:[%s1 + $0xb4] sm:$0xf]
  %v77 = vld [vmem:[%s1 + $0xb8] sm:$0xf]
  %v78 = vld [vmem:[%s1 + $0xbc] sm:$0xf]
  %v79 = vld [vmem:[%s1 + $0xc0] sm:$0xf]
  %v80 = vld [vmem:[%s1 + $0xc4] sm:$0xf]
  %v81 = vld [vmem:[%s2] sm:$0x1]
  %v83 = vlaneseq
  %v84 = vshrl.u32 %v83, 7
  %v85 = vsub.s32 0, %v84
  %v86 = vrot.slane %v81, %v85
  %v90 = vunpack.c.l.b16 %v29
  %v91 = vunpack.c.h.b16 %v29
  %v92 = vunpack.c.l.b16 %v30
  %v93 = vunpack.c.h.b16 %v30
  %v94 = vpack.c.b16 %v90, %v90
  %v95 = vpack.c.b16 %v91, %v91
  %v96 = vpack.c.b16 %v92, %v92
  %v97 = vpack.c.b16 %v93, %v93
  %v151 = vunpack.c.l.b16 %v31
  %v152 = vunpack.c.l.b16 %v32
  %v153 = vunpack.c.l.b16 %v33
  %v154 = vunpack.c.l.b16 %v34
  %v155 = vunpack.c.l.b16 %v35
  %v156 = vunpack.c.l.b16 %v36
  %v157 = vunpack.c.l.b16 %v37
  %v158 = vunpack.c.l.b16 %v38
  %v159 = vunpack.c.l.b16 %v39
  %v160 = vunpack.c.l.b16 %v40
  %v161 = vunpack.c.l.b16 %v41
  %v162 = vunpack.c.l.b16 %v42
  %v163 = vunpack.c.l.b16 %v43
  %v164 = vunpack.c.l.b16 %v44
  %v165 = vunpack.c.l.b16 %v45
  %v166 = vunpack.c.l.b16 %v46
  %v167 = vunpack.c.l.b16 %v47
  %v168 = vunpack.c.l.b16 %v48
  %v169 = vunpack.c.l.b16 %v49
  %v170 = vunpack.c.l.b16 %v50
  %v171 = vunpack.c.l.b16 %v51
  %v172 = vunpack.c.l.b16 %v52
  %v173 = vunpack.c.l.b16 %v53
  %v174 = vunpack.c.l.b16 %v54
  %v175 = vunpack.c.l.b16 %v55
  %v176 = vunpack.c.l.b16 %v56
  %v177 = vunpack.c.l.b16 %v57
  %v178 = vunpack.c.l.b16 %v58
  %v179 = vunpack.c.l.b16 %v59
  %v180 = vunpack.c.l.b16 %v60
  %v181 = vunpack.c.l.b16 %v61
  %v182 = vunpack.c.l.b16 %v62
  %v183 = vunpack.c.l.b16 %v63
  %v184 = vunpack.c.l.b16 %v64
  %v185 = vunpack.c.l.b16 %v65
  %v186 = vunpack.c.l.b16 %v66
  %v187 = vunpack.c.l.b16 %v67
  %v188 = vunpack.c.l.b16 %v68
  %v189 = vunpack.c.l.b16 %v69
  %v190 = vunpack.c.l.b16 %v70
  %v191 = vunpack.c.l.b16 %v71
  %v192 = vunpack.c.l.b16 %v72
  %v193 = vunpack.c.l.b16 %v73
  %v194 = vunpack.c.l.b16 %v74
  %v195 = vunpack.c.l.b16 %v75
  %v196 = vunpack.c.l.b16 %v76
  %v197 = vunpack.c.l.b16 %v77
  %v198 = vunpack.c.l.b16 %v78
  %v199 = vunpack.c.l.b16 %v79
  %v200 = vunpack.c.l.b16 %v80
  %v201 = vpack.c.b16 %v152, %v151
  %v202 = vpack.c.b16 %v154, %v153
  %v203 = vpack.c.b16 %v156, %v155
  %v204 = vpack.c.b16 %v158, %v157
  %v205 = vpack.c.b16 %v160, %v159
  %v206 = vpack.c.b16 %v162, %v161
  %v207 = vpack.c.b16 %v164, %v163
  %v208 = vpack.c.b16 %v166, %v165
  %v209 = vpack.c.b16 %v168, %v167
  %v210 = vpack.c.b16 %v170, %v169
  %v211 = vpack.c.b16 %v172, %v171
  %v212 = vpack.c.b16 %v174, %v173
  %v213 = vpack.c.b16 %v176, %v175
  %v214 = vpack.c.b16 %v178, %v177
  %v215 = vpack.c.b16 %v180, %v179
  %v216 = vpack.c.b16 %v182, %v181
  %v217 = vpack.c.b16 %v184, %v183
  %v218 = vpack.c.b16 %v186, %v185
  %v219 = vpack.c.b16 %v188, %v187
  %v220 = vpack.c.b16 %v190, %v189
  %v221 = vpack.c.b16 %v192, %v191
  %v222 = vpack.c.b16 %v194, %v193
  %v223 = vpack.c.b16 %v196, %v195
  %v224 = vpack.c.b16 %v198, %v197
  %v225 = vpack.c.b16 %v200, %v199
  %vm251 = vcmask 130048
  %v253 = vsel %vm251, %v97, 0
  %255 = vmatprep.subr.bf16.mxu0 0
  %256 = vmatpush1.bf16.msra.mxu0 %v208
  %257 = vmatprep.subr.bf16.mxu0 0
  %258 = vmatpush1.bf16.msra.mxu0 %v207
  %259 = vmatprep.subr.bf16.mxu0 0
  %260 = vmatpush1.bf16.msra.mxu0 %v206
  %261 = vmatprep.subr.bf16.mxu0 0
  %262 = vmatpush1.bf16.msra.mxu0 %v205
  %263 = vmatprep.subr.bf16.mxu0 0
  %264 = vmatpush1.bf16.msra.mxu0 %v204
  %265 = vmatprep.subr.bf16.mxu0 0
  %266 = vmatpush1.bf16.msra.mxu0 %v203
  %267 = vmatprep.subr.bf16.mxu0 0
  %268 = vmatpush1.bf16.msra.mxu0 %v202
  %269 = vmatprep.subr.bf16.mxu0 0
  %270 = vmatpush1.bf16.msra.mxu0 %v201
  %271 = vmatprep.subr.bf16.mxu0 0
  %272 = vmatpush2.bf16.msra.mxu0 %v216
  %273 = vmatprep.subr.bf16.mxu0 0
  %274 = vmatpush2.bf16.msra.mxu0 %v215
  %275 = vmatprep.subr.bf16.mxu0 0
  %276 = vmatpush2.bf16.msra.mxu0 %v214
  %277 = vmatprep.subr.bf16.mxu0 0
  %278 = vmatpush2.bf16.msra.mxu0 %v213
  %279 = vmatprep.subr.bf16.mxu0 0
  %280 = vmatpush2.bf16.msra.mxu0 %v212
  %281 = vmatprep.subr.bf16.mxu0 0
  %282 = vmatpush2.bf16.msra.mxu0 %v211
  %283 = vmatprep.subr.bf16.mxu0 0
  %284 = vmatpush2.bf16.msra.mxu0 %v210
  %285 = vmatprep.subr.bf16.mxu0 0
  %286 = vmatpush2.bf16.msra.mxu0 %v209
  %287 = vmatprep.mubr.bf16.mxu0 %v95
  %288 = vmatmul.mubr.bf16.gmra.mxu0 %v94
  %v289 = vpop.f32.mrf.mxu0
  %v290 = vadd.f32 %v86, %v289
  %v291 = vpop.f32.mrf.mxu0
  %v292 = vpop.f32.mrf.mxu0
  %v293 = vpop.f32.mrf.mxu0
  %294 = vdwg.mxu0
  %295 = vmatprep.subr.bf16.mxu0 0
  %296 = vmatpush1.bf16.msra.mxu0 %v224
  %297 = vmatprep.subr.bf16.mxu0 0
  %298 = vmatpush1.bf16.msra.mxu0 %v223
  %299 = vmatprep.subr.bf16.mxu0 0
  %300 = vmatpush1.bf16.msra.mxu0 %v222
  %301 = vmatprep.subr.bf16.mxu0 0
  %302 = vmatpush1.bf16.msra.mxu0 %v221
  %303 = vmatprep.subr.bf16.mxu0 0
  %304 = vmatpush1.bf16.msra.mxu0 %v220
  %305 = vmatprep.subr.bf16.mxu0 0
  %306 = vmatpush1.bf16.msra.mxu0 %v219
  %307 = vmatprep.subr.bf16.mxu0 0
  %308 = vmatpush1.bf16.msra.mxu0 %v218
  %309 = vmatprep.subr.bf16.mxu0 0
  %310 = vmatpush1.bf16.msra.mxu0 %v217
  %311 = vmatprep.subr.bf16.mxu0 0
  %312 = vmatpush2.bf16.msra.mxu0 0
  %313 = vmatprep.subr.bf16.mxu0 0
  %314 = vmatpush2.bf16.msra.mxu0 0
  %315 = vmatprep.subr.bf16.mxu0 0
  %316 = vmatpush2.bf16.msra.mxu0 0
  %317 = vmatprep.subr.bf16.mxu0 0
  %318 = vmatpush2.bf16.msra.mxu0 0
  %319 = vmatprep.subr.bf16.mxu0 0
  %320 = vmatpush2.bf16.msra.mxu0 0
  %321 = vmatprep.subr.bf16.mxu0 0
  %322 = vmatpush2.bf16.msra.mxu0 0
  %323 = vmatprep.subr.bf16.mxu0 0
  %324 = vmatpush2.bf16.msra.mxu0 0
  %325 = vmatprep.subr.bf16.mxu0 0
  %326 = vmatpush2.bf16.msra.mxu0 %v225
  %327 = vmatprep.mubr.bf16.mxu0 %v253
  %328 = vmatmul.mubr.bf16.gmra.mxu0 %v96
  %v329 = vpop.f32.mrf.mxu0
  %v330 = vadd.f32 %v290, %v329
  %v331 = vpop.f32.mrf.mxu0
  %v332 = vpop.f32.mrf.mxu0
  %v333 = vpop.f32.mrf.mxu0
  %334 = vdwg.mxu0
  %v335 = vmax.f32 %v330, 0.0
  %v336 = vpack.c.bf16 %v335, %v335
  %v337 = vld [vmem:[%s3] sm:$0xf]
  %v338 = vld [vmem:[%s3 + $0x4] sm:$0xf]
  %v339 = vld [vmem:[%s3 + $0x8] sm:$0xf]
  %v340 = vld [vmem:[%s3 + $0xc] sm:$0xf]
  %v341 = vld [vmem:[%s3 + $0x10] sm:$0xf]
  %v342 = vld [vmem:[%s3 + $0x14] sm:$0xf]
  %v343 = vld [vmem:[%s3 + $0x18] sm:$0xf]
  %v344 = vld [vmem:[%s3 + $0x1c] sm:$0xf]
  %v345 = vld [vmem:[%s3 + $0x20] sm:$0xf]
  %v346 = vld [vmem:[%s3 + $0x24] sm:$0xf]
  %v347 = vld [vmem:[%s3 + $0x28] sm:$0xf]
  %v348 = vld [vmem:[%s3 + $0x2c] sm:$0xf]
  %v349 = vld [vmem:[%s3 + $0x30] sm:$0xf]
  %v350 = vld [vmem:[%s3 + $0x34] sm:$0xf]
  %v351 = vld [vmem:[%s3 + $0x38] sm:$0xf]
  %v352 = vld [vmem:[%s3 + $0x3c] sm:$0xf]
  %v353 = vld [vmem:[%s4] sm:$0x1]
  %v355 = vlaneseq
  %v356 = vshrl.u32 %v355, 7
  %v357 = vsub.s32 0, %v356
  %v358 = vrot.slane %v353, %v357
  %v376 = vunpack.c.l.b16 %v337
  %v377 = vunpack.c.l.b16 %v338
  %v378 = vunpack.c.l.b16 %v339
  %v379 = vunpack.c.l.b16 %v340
  %v380 = vunpack.c.l.b16 %v341
  %v381 = vunpack.c.l.b16 %v342
  %v382 = vunpack.c.l.b16 %v343
  %v383 = vunpack.c.l.b16 %v344
  %v384 = vunpack.c.l.b16 %v345
  %v385 = vunpack.c.l.b16 %v346
  %v386 = vunpack.c.l.b16 %v347
  %v387 = vunpack.c.l.b16 %v348
  %v388 = vunpack.c.l.b16 %v349
  %v389 = vunpack.c.l.b16 %v350
  %v390 = vunpack.c.l.b16 %v351
  %v391 = vunpack.c.l.b16 %v352
  %v392 = vpack.c.b16 %v377, %v376
  %v393 = vpack.c.b16 %v379, %v378
  %v394 = vpack.c.b16 %v381, %v380
  %v395 = vpack.c.b16 %v383, %v382
  %v396 = vpack.c.b16 %v385, %v384
  %v397 = vpack.c.b16 %v387, %v386
  %v398 = vpack.c.b16 %v389, %v388
  %v399 = vpack.c.b16 %v391, %v390
  %408 = vmatprep.subr.bf16.mxu0 0
  %409 = vmatpush1.bf16.msra.mxu0 %v399
  %410 = vmatprep.subr.bf16.mxu0 0
  %411 = vmatpush1.bf16.msra.mxu0 %v398
  %412 = vmatprep.subr.bf16.mxu0 0
  %413 = vmatpush1.bf16.msra.mxu0 %v397
  %414 = vmatprep.subr.bf16.mxu0 0
  %415 = vmatpush1.bf16.msra.mxu0 %v396
  %416 = vmatprep.subr.bf16.mxu0 0
  %417 = vmatpush1.bf16.msra.mxu0 %v395
  %418 = vmatprep.subr.bf16.mxu0 0
  %419 = vmatpush1.bf16.msra.mxu0 %v394
  %420 = vmatprep.subr.bf16.mxu0 0
  %421 = vmatpush1.bf16.msra.mxu0 %v393
  %422 = vmatprep.subr.bf16.mxu0 0
  %423 = vmatpush1.bf16.msra.mxu0 %v392
  %424 = vmatprep.subr.bf16.mxu0 0
  %425 = vmatpush2.bf16.msra.mxu0 0
  %426 = vmatprep.subr.bf16.mxu0 0
  %427 = vmatpush2.bf16.msra.mxu0 0
  %428 = vmatprep.subr.bf16.mxu0 0
  %429 = vmatpush2.bf16.msra.mxu0 0
  %430 = vmatprep.subr.bf16.mxu0 0
  %431 = vmatpush2.bf16.msra.mxu0 0
  %432 = vmatprep.subr.bf16.mxu0 0
  %433 = vmatpush2.bf16.msra.mxu0 0
  %434 = vmatprep.subr.bf16.mxu0 0
  %435 = vmatpush2.bf16.msra.mxu0 0
  %436 = vmatprep.subr.bf16.mxu0 0
  %437 = vmatpush2.bf16.msra.mxu0 0
  %438 = vmatprep.subr.bf16.mxu0 0
  %439 = vmatpush2.bf16.msra.mxu0 0
  %440 = vmatprep.mubr.bf16.mxu0 0
  %441 = vmatmul.mubr.bf16.gmra.mxu0 %v336
  %v442 = vpop.f32.mrf.mxu0
  %v443 = vadd.f32 %v358, %v442
  %v444 = vpop.f32.mrf.mxu0
  %v445 = vpop.f32.mrf.mxu0
  %v446 = vpop.f32.mrf.mxu0
  %447 = vdwg.mxu0
  %v448 = vmax.f32 %v443, 0.0
  %449 = vst [vmem:[%s7] sm:$0xff] %v448
  %v450 = vpack.c.bf16 %v448, %v448
  %v451 = vld [vmem:[%s5] sm:$0xf]
  %v452 = vld [vmem:[%s5 + $0x4] sm:$0xf]
  %v453 = vld [vmem:[%s5 + $0x8] sm:$0xf]
  %v454 = vld [vmem:[%s5 + $0xc] sm:$0xf]
  %v455 = vld [vmem:[%s5 + $0x10] sm:$0xf]
  %v456 = vld [vmem:[%s5 + $0x14] sm:$0xf]
  %v457 = vld [vmem:[%s5 + $0x18] sm:$0xf]
  %v458 = vld [vmem:[%s5 + $0x1c] sm:$0xf]
  %v459 = vld [vmem:[%s5 + $0x20] sm:$0xf]
  %v460 = vld [vmem:[%s5 + $0x24] sm:$0xf]
  %v461 = vld [vmem:[%s5 + $0x28] sm:$0xf]
  %v462 = vld [vmem:[%s5 + $0x2c] sm:$0xf]
  %v463 = vld [vmem:[%s5 + $0x30] sm:$0xf]
  %v464 = vld [vmem:[%s5 + $0x34] sm:$0xf]
  %v465 = vld [vmem:[%s5 + $0x38] sm:$0xf]
  %v466 = vld [vmem:[%s5 + $0x3c] sm:$0xf]
  %v467 = vld [vmem:[%s6] sm:$0x1]
  %v469 = vlaneseq
  %v470 = vshrl.u32 %v469, 7
  %v471 = vsub.s32 0, %v470
  %v472 = vrot.slane %v467, %v471
  %v490 = vunpack.c.l.b16 %v451
  %v491 = vunpack.c.l.b16 %v452
  %v492 = vunpack.c.l.b16 %v453
  %v493 = vunpack.c.l.b16 %v454
  %v494 = vunpack.c.l.b16 %v455
  %v495 = vunpack.c.l.b16 %v456
  %v496 = vunpack.c.l.b16 %v457
  %v497 = vunpack.c.l.b16 %v458
  %v498 = vunpack.c.l.b16 %v459
  %v499 = vunpack.c.l.b16 %v460
  %v500 = vunpack.c.l.b16 %v461
  %v501 = vunpack.c.l.b16 %v462
  %v502 = vunpack.c.l.b16 %v463
  %v503 = vunpack.c.l.b16 %v464
  %v504 = vunpack.c.l.b16 %v465
  %v505 = vunpack.c.l.b16 %v466
  %v506 = vpack.c.b16 %v491, %v490
  %v507 = vpack.c.b16 %v493, %v492
  %v508 = vpack.c.b16 %v495, %v494
  %v509 = vpack.c.b16 %v497, %v496
  %v510 = vpack.c.b16 %v499, %v498
  %v511 = vpack.c.b16 %v501, %v500
  %v512 = vpack.c.b16 %v503, %v502
  %v513 = vpack.c.b16 %v505, %v504
  %522 = vmatprep.subr.bf16.mxu0 0
  %523 = vmatpush1.bf16.msra.mxu0 %v513
  %524 = vmatprep.subr.bf16.mxu0 0
  %525 = vmatpush1.bf16.msra.mxu0 %v512
  %526 = vmatprep.subr.bf16.mxu0 0
  %527 = vmatpush1.bf16.msra.mxu0 %v511
  %528 = vmatprep.subr.bf16.mxu0 0
  %529 = vmatpush1.bf16.msra.mxu0 %v510
  %530 = vmatprep.subr.bf16.mxu0 0
  %531 = vmatpush1.bf16.msra.mxu0 %v509
  %532 = vmatprep.subr.bf16.mxu0 0
  %533 = vmatpush1.bf16.msra.mxu0 %v508
  %534 = vmatprep.subr.bf16.mxu0 0
  %535 = vmatpush1.bf16.msra.mxu0 %v507
  %536 = vmatprep.subr.bf16.mxu0 0
  %537 = vmatpush1.bf16.msra.mxu0 %v506
  %538 = vmatprep.subr.bf16.mxu0 0
  %539 = vmatpush2.bf16.msra.mxu0 0
  %540 = vmatprep.subr.bf16.mxu0 0
  %541 = vmatpush2.bf16.msra.mxu0 0
  %542 = vmatprep.subr.bf16.mxu0 0
  %543 = vmatpush2.bf16.msra.mxu0 0
  %544 = vmatprep.subr.bf16.mxu0 0
  %545 = vmatpush2.bf16.msra.mxu0 0
  %546 = vmatprep.subr.bf16.mxu0 0
  %547 = vmatpush2.bf16.msra.mxu0 0
  %548 = vmatprep.subr.bf16.mxu0 0
  %549 = vmatpush2.bf16.msra.mxu0 0
  %550 = vmatprep.subr.bf16.mxu0 0
  %551 = vmatpush2.bf16.msra.mxu0 0
  %552 = vmatprep.subr.bf16.mxu0 0
  %553 = vmatpush2.bf16.msra.mxu0 0
  %554 = vmatprep.mubr.bf16.mxu0 0
  %555 = vmatmul.mubr.bf16.gmra.mxu0 %v450
  %v556 = vpop.f32.mrf.mxu0
  %v557 = vadd.f32 %v472, %v556
  %v558 = vpop.f32.mrf.mxu0
  %v559 = vpop.f32.mrf.mxu0
  %v560 = vpop.f32.mrf.mxu0
  %561 = vdwg.mxu0
  %562 = vst [vmem:[%s8] sm:$0xff] %v557
  // Predicated region
  $region30: #{lenet_forward.5} parent=0 // pred_check
    _
  $region31: #{lenet_forward.5} parent=0 // pred_check_branch
    %564 = sbr.rel (0) target = $region33
  $region32: #{lenet_forward.5} parent=0 // pred_region
    _
  $region33: #{lenet_forward.5} parent=0 // pred_fallthru
    _
  // Predicated region
  $region34: #{lenet_forward.5} parent=0 // pred_check
    _
  $region35: #{lenet_forward.5} parent=0 // pred_check_branch
    %566 = sbr.rel (0) target = $region37
  $region36: #{lenet_forward.5} parent=0 // pred_region
    _
  $region37: #{lenet_forward.5} parent=0 // pred_fallthru
    _
  // Predicated region
  $region38: #{lenet_forward.5} parent=0 // pred_check
    _
  $region39: #{lenet_forward.5} parent=0 // pred_check_branch
    %568 = sbr.rel (0) target = $region41
  $region40: #{lenet_forward.5} parent=0 // pred_region
    _
  $region41: #{lenet_forward.5} parent=0 // pred_fallthru
    _
  // Predicated region
  $region42: #{lenet_forward.5} parent=0 // pred_check
    _
  $region43: #{lenet_forward.5} parent=0 // pred_check_branch
    %570 = sbr.rel (0) target = $region45
  $region44: #{lenet_forward.5} parent=0 // pred_region
    _
  $region45: #{lenet_forward.5} parent=0 // pred_fallthru
    _

</llo_original>
